<compile_context>
chip_gen: v6e
topology: v6e:2x2x1
jax: 0.10.0
libtpu: 0.0.40
codegen_flags: <defaults>
</compile_context>

<pallas_src>
import functools

import jax
import jax.numpy as jnp
from jax.experimental import pallas as pl
from jax.experimental.pallas import tpu as pltpu

HIDDEN = 256
HEAD_W = 128          # lane-dense head width (cols: value, adv, q, zero-pad)


def _round_up(x, m):
    return ((x + m - 1) // m) * m


# ----------------------------------------------------------------------------
# Device heuristics (perf only; any failure falls back to safe defaults).
# ----------------------------------------------------------------------------
def _device_kind():
    try:
        return jax.devices()[0].device_kind.lower()
    except Exception:
        return ""


def _has_bf16_valu(kind):
    # v6e / v7x have a native bf16 VALU; v5e and older do not.
    return ("v6" in kind) or ("v7" in kind)


def _is_single_tensorcore(kind):
    # v5e / v6e are single-TensorCore chips; v7x (and v4/v5p megacore) are not.
    return any(t in kind for t in ("v5e", "v5 lite", "v6e", "v6 lite"))


def _choose_tiling(batch, max_block=512, prefer_single_tile=False):
    """Pick (batch_tile, padded_batch)."""
    bp = _round_up(max(batch, 1), 8)
    if bp <= 128:
        return bp, bp                      # tiny batch: single tile
    bp = _round_up(batch, 128)
    n128 = bp // 128
    max_blk = max(1, max_block // 128)
    if prefer_single_tile and n128 <= max_blk:
        return bp, bp                      # v5e/v6e: one big tile, grid=(1,)
    per = max(1, min(max_blk, n128 // 2))  # keep >= 2 grid steps (v7x megacore)
    bb = 128 * per
    return bb, _round_up(bp, bb)


# ----------------------------------------------------------------------------
# Kernel
# ----------------------------------------------------------------------------
def dueling_critic_kernel(s_ref, a_ref, wh_ref, whd_ref, bh_ref, bhd_ref,
                          out_ref, *, sd, ad, elem_dtype):
    bf16 = jnp.bfloat16
    f32 = jnp.float32

    s = s_ref[...].astype(bf16)
    a = a_ref[...].astype(bf16)

    # Static slices into the packed weight slabs (no data movement).
    w1 = wh_ref[0:sd, :]
    w3a = wh_ref[sd:sd + ad, :]
    w2 = wh_ref[sd + ad:sd + ad + HIDDEN, :]
    w3f = wh_ref[sd + ad + HIDDEN:sd + ad + 2 * HIDDEN, :]
    wv = whd_ref[0:HIDDEN, :]
    wa = whd_ref[HIDDEN:2 * HIDDEN, :]

    b1 = bh_ref[0:1, :].astype(elem_dtype)
    b2 = bh_ref[1:2, :].astype(elem_dtype)
    b3 = bh_ref[2:3, :].astype(elem_dtype)

    # feat = relu(l2(relu(l1(state))))  — MXU dots (f32 accumulation), bias/ReLU
    # in elem_dtype (bf16 on v6e/v7x, f32 on v5e).
    h1 = jnp.maximum(
        jnp.dot(s, w1, preferred_element_type=f32).astype(elem_dtype) + b1, 0)
    h1 = h1.astype(bf16)
    feat = jnp.maximum(
        jnp.dot(h1, w2, preferred_element_type=f32).astype(elem_dtype) + b2, 0)
    feat = feat.astype(bf16)

    # h3 = relu(l3(cat([feat, action], 1)))  as a split matmul (no concat).
    h3 = jnp.maximum(
        (jnp.dot(feat, w3f, preferred_element_type=f32)
         + jnp.dot(a, w3a, preferred_element_type=f32)).astype(elem_dtype) + b3, 0)
    h3 = h3.astype(bf16)

    # Fused heads: col0 = lv(feat) = value, col1 = la(h3) = adv, col2 = q,
    # cols 3..127 zero — full 128-lane (unmasked) store.
    heads = (jnp.dot(feat, wv, preferred_element_type=f32)
             + jnp.dot(h3, wa, preferred_element_type=f32)
             + bhd_ref[...])
    out_ref[...] = heads


# ----------------------------------------------------------------------------
# Wrapper
# ----------------------------------------------------------------------------
def dueling_critic_forward(state, action, params, *, max_block=512,
                           elem_dtype=None):
    B, state_dim = state.shape
    action_dim = action.shape[1]
    sd_p = _round_up(state_dim, 8)
    ad_p = _round_up(action_dim, 8)
    assert params["w_hid"].shape[0] == sd_p + ad_p + 2 * HIDDEN

    kind = _device_kind()
    if elem_dtype is None:
        elem_dtype = jnp.bfloat16 if _has_bf16_valu(kind) else jnp.float32

    bb, Bp = _choose_tiling(B, max_block=max_block,
                            prefer_single_tile=_is_single_tensorcore(kind))

    # Pad feature dims to the packed-slab segment widths and batch to the tile.
    if sd_p != state_dim:
        state = jnp.pad(state, ((0, 0), (0, sd_p - state_dim)))
    if ad_p != action_dim:
        action = jnp.pad(action, ((0, 0), (0, ad_p - action_dim)))
    if Bp != B:
        state = jnp.pad(state, ((0, Bp - B), (0, 0)))
        action = jnp.pad(action, ((0, Bp - B), (0, 0)))

    grid = (Bp // bb,)

    flops = 2 * Bp * (sd_p * HIDDEN + HIDDEN * HIDDEN
                      + (HIDDEN + ad_p) * HIDDEN + 2 * HIDDEN * HEAD_W)
    w_bytes = (params["w_hid"].size * params["w_hid"].dtype.itemsize
               + params["w_head"].size * params["w_head"].dtype.itemsize
               + params["b_hid"].size * 4 + params["b_head"].size * 4)
    io_bytes = Bp * (sd_p + ad_p) * 4 + Bp * HEAD_W * 4
    cost = pl.CostEstimate(flops=flops, transcendentals=0,
                           bytes_accessed=w_bytes + io_bytes)

    kernel = functools.partial(dueling_critic_kernel, sd=sd_p, ad=ad_p,
                               elem_dtype=elem_dtype)

    heads = pl.pallas_call(
        kernel,
        out_shape=jax.ShapeDtypeStruct((Bp, HEAD_W), jnp.float32),
        grid=grid,
        in_specs=[
            pl.BlockSpec((bb, sd_p), lambda i: (i, 0)),          # state tile
            pl.BlockSpec((bb, ad_p), lambda i: (i, 0)),          # action tile
            pl.BlockSpec(params["w_hid"].shape, lambda i: (0, 0)),   # packed hidden weights
            pl.BlockSpec(params["w_head"].shape, lambda i: (0, 0)),  # packed head weights
            pl.BlockSpec(params["b_hid"].shape, lambda i: (0, 0)),   # hidden biases (3,256)
            pl.BlockSpec(params["b_head"].shape, lambda i: (0, 0)),  # head biases (1,128)
        ],
        out_specs=pl.BlockSpec((bb, HEAD_W), lambda i: (i, 0)),
        compiler_params=pltpu.CompilerParams(
            dimension_semantics=("parallel",)),
        cost_estimate=cost,
    )(state, action, params["w_hid"], params["w_head"],
      params["b_hid"], params["b_head"])

    value = heads[:B, 0:1]
    adv = heads[:B, 1:2]
    q = heads[:B, 2:3]          # q = value + adv, fused into the head matmul
    return value, adv, q


# ----------------------------------------------------------------------------
# Parameter construction (nn.Linear-style init) + packing
# ----------------------------------------------------------------------------
def init_params(key, state_dim, action_dim, w_dtype=jnp.bfloat16):
    """Returns (packed_params_for_kernel, raw_f32_params_for_reference)."""
    def linear(k, fan_in, fan_out):
        kw, kb = jax.random.split(k)
        bound = 1.0 / (fan_in ** 0.5)
        w = jax.random.uniform(kw, (fan_in, fan_out), jnp.float32, -bound, bound)
        b = jax.random.uniform(kb, (fan_out,), jnp.float32, -bound, bound)
        return w, b

    k1, k2, kv, k3, ka = jax.random.split(key, 5)
    w1, b1 = linear(k1, state_dim, HIDDEN)
    w2, b2 = linear(k2, HIDDEN, HIDDEN)
    wv, bv = linear(kv, HIDDEN, 1)
    w3, b3 = linear(k3, HIDDEN + action_dim, HIDDEN)
    wa, ba = linear(ka, HIDDEN, 1)

    sd_p = _round_up(state_dim, 8)
    ad_p = _round_up(action_dim, 8)

    w3f = w3[:HIDDEN]
    w3a = w3[HIDDEN:]
    w1_p = jnp.zeros((sd_p, HIDDEN), jnp.float32).at[:state_dim].set(w1)
    w3a_p = jnp.zeros((ad_p, HIDDEN), jnp.float32).at[:action_dim].set(w3a)
    w_hid = jnp.concatenate([w1_p, w3a_p, w2, w3f], axis=0).astype(w_dtype)

    # Head slab (512, 128): col0 = value, col1 = adv, col2 = q = value + adv.
    wv_cols = jnp.zeros((HIDDEN, HEAD_W), jnp.float32)
    wv_cols = wv_cols.at[:, 0].set(wv[:, 0]).at[:, 2].set(wv[:, 0])
    wa_cols = jnp.zeros((HIDDEN, HEAD_W), jnp.float32)
    wa_cols = wa_cols.at[:, 1].set(wa[:, 0]).at[:, 2].set(wa[:, 0])
    w_head = jnp.concatenate([wv_cols, wa_cols], axis=0).astype(w_dtype)

    b_hid = jnp.stack([b1, b2, b3], axis=0)                      # (3, 256) f32
    b_head = jnp.zeros((1, HEAD_W), jnp.float32)
    b_head = b_head.at[0, 0].set(bv[0]).at[0, 1].set(ba[0]).at[0, 2].set(bv[0] + ba[0])

    packed = {"w_hid": w_hid, "w_head": w_head, "b_hid": b_hid, "b_head": b_head}
    raw = {"w1": w1, "b1": b1, "w2": w2, "b2": b2, "wv": wv, "bv": bv,
           "w3": w3, "b3": b3, "wa": wa, "ba": ba}
    return packed, raw


# ----------------------------------------------------------------------------
# References
# ----------------------------------------------------------------------------
def reference_forward_f32(state, action, r):
    """Exact PyTorch-module math in plain f32 JAX (the spec)."""
    h1 = jax.nn.relu(state @ r["w1"] + r["b1"])
    feat = jax.nn.relu(h1 @ r["w2"] + r["b2"])
    value = feat @ r["wv"] + r["bv"]
    h3 = jax.nn.relu(jnp.concatenate([feat, action], axis=1) @ r["w3"] + r["b3"])
    adv = h3 @ r["wa"] + r["ba"]
    return value, adv, value + adv


def reference_forward_mirror(state, action, params, *, elem_dtype):
    """Pure-JAX mirror of the kernel's bf16-weight / elem_dtype math."""
    bf16, f32 = jnp.bfloat16, jnp.float32
    sd_p = _round_up(state.shape[1], 8)
    ad_p = _round_up(action.shape[1], 8)
    state = jnp.pad(state, ((0, 0), (0, sd_p - state.shape[1])))
    action = jnp.pad(action, ((0, 0), (0, ad_p - action.shape[1])))
    wh, whd = params["w_hid"], params["w_head"]
    w1, w3a = wh[:sd_p], wh[sd_p:sd_p + ad_p]
    w2 = wh[sd_p + ad_p:sd_p + ad_p + HIDDEN]
    w3f = wh[sd_p + ad_p + HIDDEN:]
    wv, wa = whd[:HIDDEN], whd[HIDDEN:]
    b1, b2, b3 = (params["b_hid"][i:i + 1].astype(elem_dtype) for i in range(3))

    dot = lambda x, w: jnp.dot(x.astype(bf16), w, preferred_element_type=f32)
    h1 = jnp.maximum(dot(state, w1).astype(elem_dtype) + b1, 0)
    feat = jnp.maximum(dot(h1, w2).astype(elem_dtype) + b2, 0)
    h3 = jnp.maximum((dot(feat, w3f) + dot(action, w3a)).astype(elem_dtype) + b3, 0)
    heads = dot(feat, wv) + dot(h3, wa) + params["b_head"]
    return heads[:, 0:1], heads[:, 1:2], heads[:, 2:3]


if __name__ == "__main__":
    key = jax.random.PRNGKey(0)
    k_param, k_state, k_action = jax.random.split(key, 3)

    # Small RL-critic shapes; batch=256 exercises a multi-tile batch grid
    # (or one big tile on single-TC chips).
    batch, state_dim, action_dim = 256, 16, 8
    params, raw = init_params(k_param, state_dim, action_dim)
    state = jax.random.normal(k_state, (batch, state_dim), jnp.float32)
    action = jax.random.normal(k_action, (batch, action_dim), jnp.float32)

    value, adv, q = dueling_critic_forward(state, action, params)
    jax.block_until_ready((value, adv, q))

    # Tight check: pure-JAX mirror of the kernel's precision choices.
    elem_dtype = jnp.bfloat16 if _has_bf16_valu(_device_kind()) else jnp.float32
    v_m, a_m, q_m = reference_forward_mirror(state, action, params,
                                             elem_dtype=elem_dtype)
    assert jnp.allclose(value, v_m, atol=5e-3, rtol=5e-3), "value mismatch (mirror)"
    assert jnp.allclose(adv, a_m, atol=5e-3, rtol=5e-3), "adv mismatch (mirror)"
    assert jnp.allclose(q, q_m, atol=5e-3, rtol=5e-3), "q mismatch (mirror)"

    # Loose check: exact module semantics in f32 (catches packing/layout bugs).
    v_f, a_f, q_f = reference_forward_f32(state, action, raw)
    assert jnp.allclose(value, v_f, atol=3e-2, rtol=3e-2), "value mismatch (f32 module)"
    assert jnp.allclose(adv, a_f, atol=3e-2, rtol=3e-2), "adv mismatch (f32 module)"
    assert jnp.allclose(q, q_f, atol=3e-2, rtol=3e-2), "q mismatch (f32 module)"

    print("KERNEL_OK")
</pallas_src>

<mosaic_0001>
module attributes {stable_mosaic.version = 11 : i64} {
  func.func @dueling_critic_kernel(%arg0: i32, %arg1: memref<128x16xf32, #tpu.memory_space<vmem>>, %arg2: memref<128x8xf32, #tpu.memory_space<vmem>>, %arg3: memref<536x256xbf16, #tpu.memory_space<vmem>>, %arg4: memref<512x128xbf16, #tpu.memory_space<vmem>>, %arg5: memref<3x256xf32, #tpu.memory_space<vmem>>, %arg6: memref<1x128xf32, #tpu.memory_space<vmem>>, %arg7: memref<128x128xf32, #tpu.memory_space<vmem>>) attributes {dimension_semantics = [#tpu.dimension_semantics<parallel>], iteration_bounds = array<i64: 2>, scalar_prefetch = 0 : i64, scratch_operands = 0 : i64, tpu.core_type = #tpu.core_type<tc>, window_params = [{transform_indices = @transform_0, window_bounds = array<i64: 128, 16>}, {transform_indices = @transform_1, window_bounds = array<i64: 128, 8>}, {pipeline_mode = #tpu.pipeline_mode<synchronous>, transform_indices = @transform_2, window_bounds = array<i64: 536, 256>}, {pipeline_mode = #tpu.pipeline_mode<synchronous>, transform_indices = @transform_3, window_bounds = array<i64: 512, 128>}, {pipeline_mode = #tpu.pipeline_mode<synchronous>, transform_indices = @transform_4, window_bounds = array<i64: 3, 256>}, {pipeline_mode = #tpu.pipeline_mode<synchronous>, transform_indices = @transform_5, window_bounds = array<i64: 1, 128>}, {transform_indices = @transform_6, window_bounds = array<i64: 128, 128>}]} {
    %c0 = arith.constant 0 : index
    %c0_0 = arith.constant 0 : index
    %0 = vector.load %arg1[%c0, %c0_0] : memref<128x16xf32, #tpu.memory_space<vmem>>, vector<128x16xf32>
    %1 = arith.truncf %0 : vector<128x16xf32> to vector<128x16xbf16>
    %c0_1 = arith.constant 0 : index
    %c0_2 = arith.constant 0 : index
    %2 = vector.load %arg2[%c0_1, %c0_2] : memref<128x8xf32, #tpu.memory_space<vmem>>, vector<128x8xf32>
    %3 = arith.truncf %2 : vector<128x8xf32> to vector<128x8xbf16>
    %c0_3 = arith.constant 0 : index
    %c0_4 = arith.constant 0 : index
    %4 = vector.load %arg3[%c0_3, %c0_4] : memref<536x256xbf16, #tpu.memory_space<vmem>>, vector<16x256xbf16>
    %c16 = arith.constant 16 : index
    %c0_5 = arith.constant 0 : index
    %5 = vector.load %arg3[%c16, %c0_5] : memref<536x256xbf16, #tpu.memory_space<vmem>>, vector<8x256xbf16>
    %c24 = arith.constant 24 : index
    %c0_6 = arith.constant 0 : index
    %6 = vector.load %arg3[%c24, %c0_6] : memref<536x256xbf16, #tpu.memory_space<vmem>>, vector<256x256xbf16>
    %c280 = arith.constant 280 : index
    %c0_7 = arith.constant 0 : index
    %7 = vector.load %arg3[%c280, %c0_7] : memref<536x256xbf16, #tpu.memory_space<vmem>>, vector<256x256xbf16>
    %c0_8 = arith.constant 0 : index
    %c0_9 = arith.constant 0 : index
    %8 = vector.load %arg4[%c0_8, %c0_9] : memref<512x128xbf16, #tpu.memory_space<vmem>>, vector<256x128xbf16>
    %c256 = arith.constant 256 : index
    %c0_10 = arith.constant 0 : index
    %9 = vector.load %arg4[%c256, %c0_10] : memref<512x128xbf16, #tpu.memory_space<vmem>>, vector<256x128xbf16>
    %c0_11 = arith.constant 0 : index
    %c0_12 = arith.constant 0 : index
    %10 = vector.load %arg5[%c0_11, %c0_12] : memref<3x256xf32, #tpu.memory_space<vmem>>, vector<1x256xf32>
    %c1 = arith.constant 1 : index
    %c0_13 = arith.constant 0 : index
    %11 = vector.load %arg5[%c1, %c0_13] : memref<3x256xf32, #tpu.memory_space<vmem>>, vector<1x256xf32>
    %c2 = arith.constant 2 : index
    %c0_14 = arith.constant 0 : index
    %12 = vector.load %arg5[%c2, %c0_14] : memref<3x256xf32, #tpu.memory_space<vmem>>, vector<1x256xf32>
    %cst = arith.constant dense<0.000000e+00> : vector<128x256xf32>
    %13 = tpu.matmul %1, %4, %cst {dimension_numbers = #tpu.dot_dimension_numbers<[1], [0], [0], [1], [0, 0, 1, 1], [], []>} : vector<128x16xbf16>, vector<16x256xbf16>, vector<128x256xf32> -> vector<128x256xf32>
    %14 = vector.broadcast %10 : vector<1x256xf32> to vector<128x256xf32>
    %15 = arith.addf %13, %14 : vector<128x256xf32>
    %cst_15 = arith.constant 0.000000e+00 : f32
    %16 = vector.broadcast %cst_15 : f32 to vector<128x256xf32>
    %17 = arith.maximumf %15, %16 : vector<128x256xf32>
    %18 = arith.truncf %17 : vector<128x256xf32> to vector<128x256xbf16>
    %cst_16 = arith.constant dense<0.000000e+00> : vector<128x256xf32>
    %19 = tpu.matmul %18, %6, %cst_16 {dimension_numbers = #tpu.dot_dimension_numbers<[1], [0], [0], [1], [0, 0, 1, 1], [], []>} : vector<128x256xbf16>, vector<256x256xbf16>, vector<128x256xf32> -> vector<128x256xf32>
    %20 = vector.broadcast %11 : vector<1x256xf32> to vector<128x256xf32>
    %21 = arith.addf %19, %20 : vector<128x256xf32>
    %cst_17 = arith.constant 0.000000e+00 : f32
    %22 = vector.broadcast %cst_17 : f32 to vector<128x256xf32>
    %23 = arith.maximumf %21, %22 : vector<128x256xf32>
    %24 = arith.truncf %23 : vector<128x256xf32> to vector<128x256xbf16>
    %cst_18 = arith.constant dense<0.000000e+00> : vector<128x256xf32>
    %25 = tpu.matmul %24, %7, %cst_18 {dimension_numbers = #tpu.dot_dimension_numbers<[1], [0], [0], [1], [0, 0, 1, 1], [], []>} : vector<128x256xbf16>, vector<256x256xbf16>, vector<128x256xf32> -> vector<128x256xf32>
    %cst_19 = arith.constant dense<0.000000e+00> : vector<128x256xf32>
    %26 = tpu.matmul %3, %5, %cst_19 {dimension_numbers = #tpu.dot_dimension_numbers<[1], [0], [0], [1], [0, 0, 1, 1], [], []>} : vector<128x8xbf16>, vector<8x256xbf16>, vector<128x256xf32> -> vector<128x256xf32>
    %27 = arith.addf %25, %26 : vector<128x256xf32>
    %28 = vector.broadcast %12 : vector<1x256xf32> to vector<128x256xf32>
    %29 = arith.addf %27, %28 : vector<128x256xf32>
    %cst_20 = arith.constant 0.000000e+00 : f32
    %30 = vector.broadcast %cst_20 : f32 to vector<128x256xf32>
    %31 = arith.maximumf %29, %30 : vector<128x256xf32>
    %32 = arith.truncf %31 : vector<128x256xf32> to vector<128x256xbf16>
    %cst_21 = arith.constant dense<0.000000e+00> : vector<128x128xf32>
    %33 = tpu.matmul %24, %8, %cst_21 {dimension_numbers = #tpu.dot_dimension_numbers<[1], [0], [0], [1], [0, 0, 1, 1], [], []>} : vector<128x256xbf16>, vector<256x128xbf16>, vector<128x128xf32> -> vector<128x128xf32>
    %cst_22 = arith.constant dense<0.000000e+00> : vector<128x128xf32>
    %34 = tpu.matmul %32, %9, %cst_22 {dimension_numbers = #tpu.dot_dimension_numbers<[1], [0], [0], [1], [0, 0, 1, 1], [], []>} : vector<128x256xbf16>, vector<256x128xbf16>, vector<128x128xf32> -> vector<128x128xf32>
    %35 = arith.addf %33, %34 : vector<128x128xf32>
    %c0_23 = arith.constant 0 : index
    %c0_24 = arith.constant 0 : index
    %36 = vector.load %arg6[%c0_23, %c0_24] : memref<1x128xf32, #tpu.memory_space<vmem>>, vector<1x128xf32>
    %37 = vector.broadcast %36 : vector<1x128xf32> to vector<128x128xf32>
    %38 = arith.addf %35, %37 : vector<128x128xf32>
    %c0_25 = arith.constant 0 : index
    %c0_26 = arith.constant 0 : index
    %39 = vector.load %arg7[%c0_25, %c0_26] : memref<128x128xf32, #tpu.memory_space<vmem>>, vector<128x128xf32>
    tpu.vector_store %arg7[%c0_25, %c0_26], %38 {strides = array<i32>} : memref<128x128xf32, #tpu.memory_space<vmem>>, vector<128x128xf32>,
    return
  }
  func.func @transform_0(%arg0: i32) -> (i32, i32) {
    %c0_i32 = arith.constant 0 : i32
    %c0_i32_0 = arith.constant 0 : i32
    return %arg0, %c0_i32 : i32, i32
  }
  func.func @transform_1(%arg0: i32) -> (i32, i32) {
    %c0_i32 = arith.constant 0 : i32
    %c0_i32_0 = arith.constant 0 : i32
    return %arg0, %c0_i32 : i32, i32
  }
  func.func @transform_2(%arg0: i32) -> (i32, i32) {
    %c0_i32 = arith.constant 0 : i32
    %c0_i32_0 = arith.constant 0 : i32
    %c0_i32_1 = arith.constant 0 : i32
    return %c0_i32, %c0_i32_0 : i32, i32
  }
  func.func @transform_3(%arg0: i32) -> (i32, i32) {
    %c0_i32 = arith.constant 0 : i32
    %c0_i32_0 = arith.constant 0 : i32
    %c0_i32_1 = arith.constant 0 : i32
    return %c0_i32, %c0_i32_0 : i32, i32
  }
  func.func @transform_4(%arg0: i32) -> (i32, i32) {
    %c0_i32 = arith.constant 0 : i32
    %c0_i32_0 = arith.constant 0 : i32
    %c0_i32_1 = arith.constant 0 : i32
    return %c0_i32, %c0_i32_0 : i32, i32
  }
  func.func @transform_5(%arg0: i32) -> (i32, i32) {
    %c0_i32 = arith.constant 0 : i32
    %c0_i32_0 = arith.constant 0 : i32
    %c0_i32_1 = arith.constant 0 : i32
    return %c0_i32, %c0_i32_0 : i32, i32
  }
  func.func @transform_6(%arg0: i32) -> (i32, i32) {
    %c0_i32 = arith.constant 0 : i32
    %c0_i32_0 = arith.constant 0 : i32
    return %arg0, %c0_i32 : i32, i32
  }
}

</mosaic_0001>

<llo_original>
// kernel: tpu_custom_call.1
$region0: #{tpu_custom_call.1}
  #allocation0 [shape = 'u32[]', space=smem, size = 0x4, offset = 0x4, fixed_abs, tag = 'smem constant byte address 0x4 - core index']
  #allocation1 [shape = 'u32[144,128]{1,0:T(1,128)}', space=vmem, size = 0x12000, scoped, tag = 'internal scratch']
  %s0 = inlined_call_operand.vmem [shape: f32[256,16], index: 0, kind: input, shape index: {}]
  %s1 = inlined_call_operand.vmem [shape: f32[256,8], index: 1, kind: input, shape index: {}]
  %s2 = inlined_call_operand.vmem [shape: bf16[536,256], index: 2, kind: input, shape index: {}]
  %s3 = inlined_call_operand.hbm [shape: bf16[512,128], index: 3, kind: input, shape index: {}]
  %s4 = inlined_call_operand.vmem [shape: f32[3,256], index: 4, kind: input, shape index: {}]
  %s5 = inlined_call_operand.vmem [shape: f32[1,128], index: 5, kind: input, shape index: {}]
  %s6 = inlined_call_operand.hbm [shape: f32[256,128], index: 6, kind: output, shape index: {}]
  %s7 = sld [smem:[#allocation0]]
  $region61: #{tpu_custom_call.1} parent=0
    _
  %s9 = ssub.s32 1, %s7
  %s10 = scalar_select 0, %s9, %s7
  $region1: #{tpu_custom_call.1} parent=0
    #allocation2 [shape = 'u8[131072]{0}', space=vmem, size = 0x20000, scoped, tag = 'input window, operand 3, single buffered']
    #allocation3 [shape = 's32[2]{0}', space=sflag, size = 0x8, scoped, tag = 'scoped memory for tpu_custom_call.1']
    #allocation4 [shape = 's32[2]{0}', space=sflag, size = 0x8, scoped, tag = 'scoped memory for tpu_custom_call.1']
    #allocation5 [shape = 'u8[131072]{0}', space=vmem, size = 0x20000, scoped, tag = 'output window, operand 0']
    %11 = vsyncpa [#allocation3], 0
    %12 = vsyncpa [#allocation4], 0
    %s13 = scalar_lea.sflag [#allocation4], 1
    %14 = vsyncpa %s13, 0
    loop: start=0, step=1, limit=4
    $region2: #{tpu_custom_call.1} parent=1 // loop_pre_header
      _
    $region3: #{tpu_custom_call.1} parent=1 // loop_header
      %s16 = sphi 0, %s20
      %p17 = scmp.ge.s32.totalorder %s16, 4
      %s26 = sphi 0, %s28
      %s29 = sphi 0, %s26
      %s30 = sphi 0, %s29
      %s46 = sphi 0, %s30
      %s52 = sphi 0, %s54
      %s55 = sphi 0, %s52
      %s56 = sphi 0, %s55
      %s72 = sphi 0, %s56
      %s76 = sphi 0, %s76
      %s78 = sphi 0, %s76
      %s79 = sphi 0, %s78
      %s93 = sphi 0, %s79
      %s97 = sphi 0, %s97
      %s99 = sphi 0, %s97
      %s100 = sphi 0, %s99
      %s114 = sphi 0, %s100
      %s118 = sphi 0, %s118
      %s120 = sphi 0, %s118
      %s121 = sphi 0, %s120
      %s135 = sphi 0, %s121
      %s139 = sphi 0, %s139
      %s141 = sphi 0, %s139
      %s142 = sphi 0, %s141
      %s156 = sphi 0, %s142
      %s162 = sphi 0, %s164
      %s165 = sphi 0, %s162
      %s166 = sphi 0, %s165
      %s182 = sphi 0, %s166
    $region4: #{tpu_custom_call.1} parent=1 // loop_header_branch
      %19 = sbr.rel (%p17) target = $region8
    $region5: #{tpu_custom_call.1} parent=1 // loop_body
      %s21 = ssub.s32 %s16, 1
      %s22 = ssub.s32 %s16, 2
      %s23 = sadd.s32 %s16, 1
      %s24 = ssub.s32 %s16, %s23
      %p25 = scmp.eq.s32.totalorder %s24, 0
      %s27 = sadd.s32 %s26, 1
      %s28 = scalar_select %p25, %s26, %s27
      %p31 = pneg %p25
      %p32 = scmp.eq.s32.totalorder %s16, 1
      %p33 = por %p31, %p32
      %p34 = scmp.ne.s32.totalorder %s26, %s29
      %p35 = scmp.eq.s32.totalorder %s16, 0
      %p36 = por %p34, %p35
      %p37 = scmp.ne.s32.totalorder %s26, %s29
      %p38 = scmp.eq.s32.totalorder %s21, 1
      %p39 = por %p37, %p38
      %p40 = scmp.ne.s32.totalorder %s29, %s30
      %p41 = scmp.eq.s32.totalorder %s21, 0
      %p42 = por %p40, %p41
      %p43 = scmp.ne.s32.totalorder %s29, %s30
      %p44 = scmp.eq.s32.totalorder %s22, 1
      %p45 = por %p43, %p44
      %p47 = scmp.ne.s32.totalorder %s30, %s46
      %p48 = scmp.eq.s32.totalorder %s22, 0
      %p49 = por %p47, %p48
      %s50 = ssub.s32 %s16, %s23
      %p51 = scmp.eq.s32.totalorder %s50, 0
      %s53 = sadd.s32 %s52, 1
      %s54 = scalar_select %p51, %s52, %s53
      %p57 = pneg %p51
      %p58 = scmp.eq.s32.totalorder %s16, 1
      %p59 = por %p57, %p58
      %p60 = scmp.ne.s32.totalorder %s52, %s55
      %p61 = scmp.eq.s32.totalorder %s16, 0
      %p62 = por %p60, %p61
      %p63 = scmp.ne.s32.totalorder %s52, %s55
      %p64 = scmp.eq.s32.totalorder %s21, 1
      %p65 = por %p63, %p64
      %p66 = scmp.ne.s32.totalorder %s55, %s56
      %p67 = scmp.eq.s32.totalorder %s21, 0
      %p68 = por %p66, %p67
      %p69 = scmp.ne.s32.totalorder %s55, %s56
      %p70 = scmp.eq.s32.totalorder %s22, 1
      %p71 = por %p69, %p70
      %p73 = scmp.ne.s32.totalorder %s56, %s72
      %p74 = scmp.eq.s32.totalorder %s22, 0
      %p75 = por %p73, %p74
      %s77 = sadd.s32 %s76, 1
      %p80 = scmp.eq.s32.totalorder %s16, 1
      %p81 = scmp.ne.s32.totalorder %s76, %s78
      %p82 = scmp.eq.s32.totalorder %s16, 0
      %p83 = por %p81, %p82
      %p84 = scmp.ne.s32.totalorder %s76, %s78
      %p85 = scmp.eq.s32.totalorder %s21, 1
      %p86 = por %p84, %p85
      %p87 = scmp.ne.s32.totalorder %s78, %s79
      %p88 = scmp.eq.s32.totalorder %s21, 0
      %p89 = por %p87, %p88
      %p90 = scmp.ne.s32.totalorder %s78, %s79
      %p91 = scmp.eq.s32.totalorder %s22, 1
      %p92 = por %p90, %p91
      %p94 = scmp.ne.s32.totalorder %s79, %s93
      %p95 = scmp.eq.s32.totalorder %s22, 0
      %p96 = por %p94, %p95
      %s98 = sadd.s32 %s97, 1
      %p101 = scmp.eq.s32.totalorder %s16, 1
      %p102 = scmp.ne.s32.totalorder %s97, %s99
      %p103 = scmp.eq.s32.totalorder %s16, 0
      %p104 = por %p102, %p103
      %p105 = scmp.ne.s32.totalorder %s97, %s99
      %p106 = scmp.eq.s32.totalorder %s21, 1
      %p107 = por %p105, %p106
      %p108 = scmp.ne.s32.totalorder %s99, %s100
      %p109 = scmp.eq.s32.totalorder %s21, 0
      %p110 = por %p108, %p109
      %p111 = scmp.ne.s32.totalorder %s99, %s100
      %p112 = scmp.eq.s32.totalorder %s22, 1
      %p113 = por %p111, %p112
      %p115 = scmp.ne.s32.totalorder %s100, %s114
      %p116 = scmp.eq.s32.totalorder %s22, 0
      %p117 = por %p115, %p116
      %s119 = sadd.s32 %s118, 1
      %p122 = scmp.eq.s32.totalorder %s16, 1
      %p123 = scmp.ne.s32.totalorder %s118, %s120
      %p124 = scmp.eq.s32.totalorder %s16, 0
      %p125 = por %p123, %p124
      %p126 = scmp.ne.s32.totalorder %s118, %s120
      %p127 = scmp.eq.s32.totalorder %s21, 1
      %p128 = por %p126, %p127
      %p129 = scmp.ne.s32.totalorder %s120, %s121
      %p130 = scmp.eq.s32.totalorder %s21, 0
      %p131 = por %p129, %p130
      %p132 = scmp.ne.s32.totalorder %s120, %s121
      %p133 = scmp.eq.s32.totalorder %s22, 1
      %p134 = por %p132, %p133
      %p136 = scmp.ne.s32.totalorder %s121, %s135
      %p137 = scmp.eq.s32.totalorder %s22, 0
      %p138 = por %p136, %p137
      %s140 = sadd.s32 %s139, 1
      %p143 = scmp.eq.s32.totalorder %s16, 1
      %p144 = scmp.ne.s32.totalorder %s139, %s141
      %p145 = scmp.eq.s32.totalorder %s16, 0
      %p146 = por %p144, %p145
      %p147 = scmp.ne.s32.totalorder %s139, %s141
      %p148 = scmp.eq.s32.totalorder %s21, 1
      %p149 = por %p147, %p148
      %p150 = scmp.ne.s32.totalorder %s141, %s142
      %p151 = scmp.eq.s32.totalorder %s21, 0
      %p152 = por %p150, %p151
      %p153 = scmp.ne.s32.totalorder %s141, %s142
      %p154 = scmp.eq.s32.totalorder %s22, 1
      %p155 = por %p153, %p154
      %p157 = scmp.ne.s32.totalorder %s142, %s156
      %p158 = scmp.eq.s32.totalorder %s22, 0
      %p159 = por %p157, %p158
      %s160 = ssub.s32 %s16, %s23
      %p161 = scmp.eq.s32.totalorder %s160, 0
      %s163 = sadd.s32 %s162, 1
      %s164 = scalar_select %p161, %s162, %s163
      %p167 = pneg %p161
      %p168 = scmp.eq.s32.totalorder %s16, 1
      %p169 = por %p167, %p168
      %p170 = scmp.ne.s32.totalorder %s162, %s165
      %p171 = scmp.eq.s32.totalorder %s16, 0
      %p172 = por %p170, %p171
      %p173 = scmp.ne.s32.totalorder %s162, %s165
      %p174 = scmp.eq.s32.totalorder %s21, 1
      %p175 = por %p173, %p174
      %p176 = scmp.ne.s32.totalorder %s165, %s166
      %p177 = scmp.eq.s32.totalorder %s21, 0
      %p178 = por %p176, %p177
      %p179 = scmp.ne.s32.totalorder %s165, %s166
      %p180 = scmp.eq.s32.totalorder %s22, 1
      %p181 = por %p179, %p180
      %p183 = scmp.ne.s32.totalorder %s166, %s182
      %p184 = scmp.eq.s32.totalorder %s22, 0
      %p185 = por %p183, %p184
      %p186 = scmp.le.s32.totalorder 1, %s16
      %p187 = scmp.lt.s32.totalorder %s16, 3
      %p188 = pnand %p186, %p187
      %p189 = pneg %p188
      // Predicated region
      $region9: #{tpu_custom_call.1} parent=5 // pred_check
        _
      $region10: #{tpu_custom_call.1} parent=5 // pred_check_branch
        %191 = sbr.rel (%p188) target = $region12
      $region11: #{tpu_custom_call.1} parent=5 // pred_region
        %s192 = ssub.s32 %s16, 1
        // Predicated region
        $region13: #{tpu_custom_call.1} parent=11 // pred_check
          %p193 = pneg %p89
        $region14: #{tpu_custom_call.1} parent=11 // pred_check_branch
          %195 = sbr.rel (%p193) target = $region16
        $region15: #{tpu_custom_call.1} parent=11 // pred_region
          _
        $region16: #{tpu_custom_call.1} parent=11 // pred_fallthru
          _
        // Predicated region
        $region17: #{tpu_custom_call.1} parent=11 // pred_check
          %p196 = pneg %p110
        $region18: #{tpu_custom_call.1} parent=11 // pred_check_branch
          %198 = sbr.rel (%p196) target = $region20
        $region19: #{tpu_custom_call.1} parent=11 // pred_region
          %s200 = ssub.s32 4096, 4096
          %201 = vsyncadd [#allocation3], %s200
          %s202 = sshll.u32 [#allocation2], 4
          %s203 = int_to_ptr.vmem [resolvable:$true] %s202
          %208 = dma.hbm_to_vmem [thread:$0]  %s3, 4096, %s203, [#allocation3], 64, 64, 4
        $region20: #{tpu_custom_call.1} parent=11 // pred_fallthru
          _
        // Predicated region
        $region21: #{tpu_custom_call.1} parent=11 // pred_check
          %p209 = pneg %p131
        $region22: #{tpu_custom_call.1} parent=11 // pred_check_branch
          %211 = sbr.rel (%p209) target = $region24
        $region23: #{tpu_custom_call.1} parent=11 // pred_region
          _
        $region24: #{tpu_custom_call.1} parent=11 // pred_fallthru
          _
        // Predicated region
        $region25: #{tpu_custom_call.1} parent=11 // pred_check
          %p212 = pneg %p152
        $region26: #{tpu_custom_call.1} parent=11 // pred_check_branch
          %214 = sbr.rel (%p212) target = $region28
        $region27: #{tpu_custom_call.1} parent=11 // pred_region
          _
        $region28: #{tpu_custom_call.1} parent=11 // pred_fallthru
          _
      $region12: #{tpu_custom_call.1} parent=5 // pred_fallthru
        _
      %p215 = scmp.lt.s32.totalorder %s16, 2
      // Predicated region
      $region29: #{tpu_custom_call.1} parent=5 // pred_check
        %p216 = pneg %p215
      $region30: #{tpu_custom_call.1} parent=5 // pred_check_branch
        %218 = sbr.rel (%p216) target = $region32
      $region31: #{tpu_custom_call.1} parent=5 // pred_region
        // Predicated region
        $region33: #{tpu_custom_call.1} parent=31 // pred_check
          %p219 = pneg %p36
        $region34: #{tpu_custom_call.1} parent=31 // pred_check_branch
          %221 = sbr.rel (%p219) target = $region36
        $region35: #{tpu_custom_call.1} parent=31 // pred_region
          %s222 = smul.u32 16, %s16
          %p223 = scmp.lt.s32.totalorder %s222, 31
          %s224 = scalar_select %p223, %s222, 31
          %s225 = smul.addr %s224, 8
          %s226 = scalar_lea.vmem %s0, %s225
          %s227 = smul.u32 16, %s16
        $region36: #{tpu_custom_call.1} parent=31 // pred_fallthru
          _
        // Predicated region
        $region37: #{tpu_custom_call.1} parent=31 // pred_check
          %p228 = pneg %p62
        $region38: #{tpu_custom_call.1} parent=31 // pred_check_branch
          %230 = sbr.rel (%p228) target = $region40
        $region39: #{tpu_custom_call.1} parent=31 // pred_region
          %s231 = smul.u32 16, %s16
          %p232 = scmp.lt.s32.totalorder %s231, 31
          %s233 = scalar_select %p232, %s231, 31
          %s234 = smul.addr %s233, 8
          %s235 = scalar_lea.vmem %s1, %s234
          %s236 = smul.u32 16, %s16
        $region40: #{tpu_custom_call.1} parent=31 // pred_fallthru
          _
      $region32: #{tpu_custom_call.1} parent=5 // pred_fallthru
        _
      %p237 = scmp.le.s32.totalorder 1, %s16
      %p238 = scmp.lt.s32.totalorder %s16, 3
      %p239 = pnand %p237, %p238
      %p240 = pneg %p239
      // Predicated region
      $region41: #{tpu_custom_call.1} parent=5 // pred_check
        _
      $region42: #{tpu_custom_call.1} parent=5 // pred_check_branch
        %242 = sbr.rel (%p239) target = $region44
      $region43: #{tpu_custom_call.1} parent=5 // pred_region
        %s243 = ssub.s32 %s16, 1
        // Predicated region
        $region45: #{tpu_custom_call.1} parent=43 // pred_check
          %p244 = pneg %p110
        $region46: #{tpu_custom_call.1} parent=43 // pred_check_branch
          %246 = sbr.rel (%p244) target = $region48
        $region47: #{tpu_custom_call.1} parent=43 // pred_region
          %247 = dma.done [#allocation3], 4096
        $region48: #{tpu_custom_call.1} parent=43 // pred_fallthru
          _
        %s248 = smul.u32 16, %s21
        %p249 = scmp.lt.s32.totalorder %s248, 31
        %s250 = scalar_select %p249, %s248, 31
        %s251 = smul.addr %s250, 8
        %s252 = scalar_lea.vmem %s0, %s251
        %p253 = pneg %p42
        %p254 = pneg %p39
        %s255 = smul.u32 16, %s21
        %p256 = scmp.lt.s32.totalorder %s255, 31
        %s257 = scalar_select %p256, %s255, 31
        %s258 = smul.addr %s257, 8
        %s259 = scalar_lea.vmem %s1, %s258
        %p260 = pneg %p68
        %p261 = pneg %p65
        %p262 = pneg %p89
        %p263 = pneg %p86
        %p264 = pneg %p110
        %p265 = pneg %p107
        %p266 = pneg %p131
        %p267 = pneg %p128
        %p268 = pneg %p152
        %p269 = pneg %p149
        %p270 = pneg %p178
        %p271 = pneg %p175
        %s272 = sand.u32 %s165, 1
        %s273 = scalar_lea.sflag [#allocation4], %s272
        %s274 = sand.u32 %s165, 1
        %s275 = smul.addr %s274, 128
        %s276 = scalar_lea.vmem [#allocation5], %s275
        %s277 = smul.u32 16, %s21
        %p278 = scmp.lt.s32.totalorder %s277, 31
        %s279 = scalar_select %p278, %s277, 31
        %s280 = smul.addr %s279, 8
        %s281 = scalar_lea.vmem %s0, %s280
        %s282 = smul.u32 16, %s21
        %s283 = smul.u32 16, %s21
        %p284 = scmp.lt.s32.totalorder %s283, 31
        %s285 = scalar_select %p284, %s283, 31
        %s286 = smul.addr %s285, 8
        %s287 = scalar_lea.vmem %s1, %s286
        %s288 = smul.u32 16, %s21
        %s289 = smul.u32 16, %s21
        %v291 = vld [vmem:[%s281] sm:$0xff]
        %v292 = vld [vmem:[%s281 + $0x8] sm:$0xff]
        %v293 = vld [vmem:[%s281 + $0x10] sm:$0xff]
        %v294 = vld [vmem:[%s281 + $0x18] sm:$0xff]
        %v295 = vld [vmem:[%s281 + $0x20] sm:$0xff]
        %v296 = vld [vmem:[%s281 + $0x28] sm:$0xff]
        %v297 = vld [vmem:[%s281 + $0x30] sm:$0xff]
        %v298 = vld [vmem:[%s281 + $0x38] sm:$0xff]
        %v299 = vld [vmem:[%s281 + $0x40] sm:$0xff]
        %v300 = vld [vmem:[%s281 + $0x48] sm:$0xff]
        %v301 = vld [vmem:[%s281 + $0x50] sm:$0xff]
        %v302 = vld [vmem:[%s281 + $0x58] sm:$0xff]
        %v303 = vld [vmem:[%s281 + $0x60] sm:$0xff]
        %v304 = vld [vmem:[%s281 + $0x68] sm:$0xff]
        %v305 = vld [vmem:[%s281 + $0x70] sm:$0xff]
        %v306 = vld [vmem:[%s281 + $0x78] sm:$0xff]
        %v307 = vpack.c.bf16 %v292, %v291
        %v308 = vpack.c.bf16 %v294, %v293
        %v309 = vpack.c.bf16 %v296, %v295
        %v310 = vpack.c.bf16 %v298, %v297
        %v311 = vpack.c.bf16 %v300, %v299
        %v312 = vpack.c.bf16 %v302, %v301
        %v313 = vpack.c.bf16 %v304, %v303
        %v314 = vpack.c.bf16 %v306, %v305
        %v315 = vld [vmem:[%s287] sm:$0xff]
        %v316 = vld [vmem:[%s287 + $0x8] sm:$0xff]
        %v317 = vld [vmem:[%s287 + $0x10] sm:$0xff]
        %v318 = vld [vmem:[%s287 + $0x18] sm:$0xff]
        %v319 = vld [vmem:[%s287 + $0x20] sm:$0xff]
        %v320 = vld [vmem:[%s287 + $0x28] sm:$0xff]
        %v321 = vld [vmem:[%s287 + $0x30] sm:$0xff]
        %v322 = vld [vmem:[%s287 + $0x38] sm:$0xff]
        %v323 = vld [vmem:[%s287 + $0x40] sm:$0xff]
        %v324 = vld [vmem:[%s287 + $0x48] sm:$0xff]
        %v325 = vld [vmem:[%s287 + $0x50] sm:$0xff]
        %v326 = vld [vmem:[%s287 + $0x58] sm:$0xff]
        %v327 = vld [vmem:[%s287 + $0x60] sm:$0xff]
        %v328 = vld [vmem:[%s287 + $0x68] sm:$0xff]
        %v329 = vld [vmem:[%s287 + $0x70] sm:$0xff]
        %v330 = vld [vmem:[%s287 + $0x78] sm:$0xff]
        %v331 = vpack.c.bf16 %v316, %v315
        %v332 = vpack.c.bf16 %v318, %v317
        %v333 = vpack.c.bf16 %v320, %v319
        %v334 = vpack.c.bf16 %v322, %v321
        %v335 = vpack.c.bf16 %v324, %v323
        %v336 = vpack.c.bf16 %v326, %v325
        %v337 = vpack.c.bf16 %v328, %v327
        %v338 = vpack.c.bf16 %v330, %v329
        %v339 = vld [vmem:[%s2] sm:$0xff]
        %v340 = vld [vmem:[%s2 + $0x8] sm:$0xff]
        %v341 = vld [vmem:[%s2 + $0x10] sm:$0xff]
        %v342 = vld [vmem:[%s2 + $0x18] sm:$0xff]
        %v343 = vld [vmem:[%s2 + $0x20] sm:$0xff]
        %v344 = vld [vmem:[%s2 + $0x28] sm:$0xff]
        %v345 = vld [vmem:[%s2 + $0x30] sm:$0xff]
        %v346 = vld [vmem:[%s2 + $0x38] sm:$0xff]
        %v347 = vld [vmem:[%s2 + $0x40] sm:$0xff]
        %v348 = vld [vmem:[%s2 + $0x48] sm:$0xff]
        %v349 = vld [vmem:[%s2 + $0x50] sm:$0xff]
        %v350 = vld [vmem:[%s2 + $0x58] sm:$0xff]
        %v351 = vld [vmem:[%s2 + $0x60] sm:$0xff]
        %v352 = vld [vmem:[%s2 + $0x68] sm:$0xff]
        %v353 = vld [vmem:[%s2 + $0x70] sm:$0xff]
        %v354 = vld [vmem:[%s2 + $0x78] sm:$0xff]
        %v355 = vld [vmem:[%s2 + $0x80] sm:$0xff]
        %v356 = vld [vmem:[%s2 + $0x88] sm:$0xff]
        %v357 = vld [vmem:[%s2 + $0x90] sm:$0xff]
        %v358 = vld [vmem:[%s2 + $0x98] sm:$0xff]
        %v359 = vld [vmem:[%s2 + $0xa0] sm:$0xff]
        %v360 = vld [vmem:[%s2 + $0xa8] sm:$0xff]
        %v361 = vld [vmem:[%s2 + $0xb0] sm:$0xff]
        %v362 = vld [vmem:[%s2 + $0xb8] sm:$0xff]
        %v363 = vld [vmem:[%s2 + $0xc0] sm:$0xff]
        %v364 = vld [vmem:[%s2 + $0xc8] sm:$0xff]
        %v365 = vld [vmem:[%s2 + $0xd0] sm:$0xff]
        %v366 = vld [vmem:[%s2 + $0xd8] sm:$0xff]
        %v367 = vld [vmem:[%s2 + $0xe0] sm:$0xff]
        %v368 = vld [vmem:[%s2 + $0xe8] sm:$0xff]
        %v369 = vld [vmem:[%s2 + $0xf0] sm:$0xff]
        %v370 = vld [vmem:[%s2 + $0xf8] sm:$0xff]
        %v371 = vld [vmem:[%s2 + $0x100] sm:$0xff]
        %v372 = vld [vmem:[%s2 + $0x108] sm:$0xff]
        %v373 = vld [vmem:[%s2 + $0x110] sm:$0xff]
        %v374 = vld [vmem:[%s2 + $0x118] sm:$0xff]
        %v375 = vld [vmem:[%s2 + $0x120] sm:$0xff]
        %v376 = vld [vmem:[%s2 + $0x128] sm:$0xff]
        %v377 = vld [vmem:[%s2 + $0x130] sm:$0xff]
        %v378 = vld [vmem:[%s2 + $0x138] sm:$0xff]
        %v379 = vld [vmem:[%s2 + $0x140] sm:$0xff]
        %v380 = vld [vmem:[%s2 + $0x148] sm:$0xff]
        %v381 = vld [vmem:[%s2 + $0x150] sm:$0xff]
        %v382 = vld [vmem:[%s2 + $0x158] sm:$0xff]
        %v383 = vld [vmem:[%s2 + $0x160] sm:$0xff]
        %v384 = vld [vmem:[%s2 + $0x168] sm:$0xff]
        %v385 = vld [vmem:[%s2 + $0x170] sm:$0xff]
        %v386 = vld [vmem:[%s2 + $0x178] sm:$0xff]
        %v387 = vld [vmem:[%s2 + $0x180] sm:$0xff]
        %v388 = vld [vmem:[%s2 + $0x188] sm:$0xff]
        %v389 = vld [vmem:[%s2 + $0x190] sm:$0xff]
        %v390 = vld [vmem:[%s2 + $0x198] sm:$0xff]
        %v391 = vld [vmem:[%s2 + $0x1a0] sm:$0xff]
        %v392 = vld [vmem:[%s2 + $0x1a8] sm:$0xff]
        %v393 = vld [vmem:[%s2 + $0x1b0] sm:$0xff]
        %v394 = vld [vmem:[%s2 + $0x1b8] sm:$0xff]
        %v395 = vld [vmem:[%s2 + $0x1c0] sm:$0xff]
        %v396 = vld [vmem:[%s2 + $0x1c8] sm:$0xff]
        %v397 = vld [vmem:[%s2 + $0x1d0] sm:$0xff]
        %v398 = vld [vmem:[%s2 + $0x1d8] sm:$0xff]
        %v399 = vld [vmem:[%s2 + $0x1e0] sm:$0xff]
        %v400 = vld [vmem:[%s2 + $0x1e8] sm:$0xff]
        %v401 = vld [vmem:[%s2 + $0x1f0] sm:$0xff]
        %v402 = vld [vmem:[%s2 + $0x1f8] sm:$0xff]
        %v403 = vld [vmem:[%s2 + $0x200] sm:$0xff]
        %v404 = vld [vmem:[%s2 + $0x208] sm:$0xff]
        %v405 = vld [vmem:[%s2 + $0x210] sm:$0xff]
        %v406 = vld [vmem:[#allocation2] sm:$0xf]
        %v407 = vld [vmem:[#allocation2 + $0x4] sm:$0xf]
        %v408 = vld [vmem:[#allocation2 + $0x8] sm:$0xf]
        %v409 = vld [vmem:[#allocation2 + $0xc] sm:$0xf]
        %v410 = vld [vmem:[#allocation2 + $0x10] sm:$0xf]
        %v411 = vld [vmem:[#allocation2 + $0x14] sm:$0xf]
        %v412 = vld [vmem:[#allocation2 + $0x18] sm:$0xf]
        %v413 = vld [vmem:[#allocation2 + $0x1c] sm:$0xf]
        %v414 = vld [vmem:[#allocation2 + $0x20] sm:$0xf]
        %v415 = vld [vmem:[#allocation2 + $0x24] sm:$0xf]
        %v416 = vld [vmem:[#allocation2 + $0x28] sm:$0xf]
        %v417 = vld [vmem:[#allocation2 + $0x2c] sm:$0xf]
        %v418 = vld [vmem:[#allocation2 + $0x30] sm:$0xf]
        %v419 = vld [vmem:[#allocation2 + $0x34] sm:$0xf]
        %v420 = vld [vmem:[#allocation2 + $0x38] sm:$0xf]
        %v421 = vld [vmem:[#allocation2 + $0x3c] sm:$0xf]
        %v422 = vld [vmem:[#allocation2 + $0x40] sm:$0xf]
        %v423 = vld [vmem:[#allocation2 + $0x44] sm:$0xf]
        %v424 = vld [vmem:[#allocation2 + $0x48] sm:$0xf]
        %v425 = vld [vmem:[#allocation2 + $0x4c] sm:$0xf]
        %v426 = vld [vmem:[#allocation2 + $0x50] sm:$0xf]
        %v427 = vld [vmem:[#allocation2 + $0x54] sm:$0xf]
        %v428 = vld [vmem:[#allocation2 + $0x58] sm:$0xf]
        %v429 = vld [vmem:[#allocation2 + $0x5c] sm:$0xf]
        %v430 = vld [vmem:[#allocation2 + $0x60] sm:$0xf]
        %v431 = vld [vmem:[#allocation2 + $0x64] sm:$0xf]
        %v432 = vld [vmem:[#allocation2 + $0x68] sm:$0xf]
        %v433 = vld [vmem:[#allocation2 + $0x6c] sm:$0xf]
        %v434 = vld [vmem:[#allocation2 + $0x70] sm:$0xf]
        %v435 = vld [vmem:[#allocation2 + $0x74] sm:$0xf]
        %v436 = vld [vmem:[#allocation2 + $0x78] sm:$0xf]
        %v437 = vld [vmem:[#allocation2 + $0x7c] sm:$0xf]
        %v438 = vld [vmem:[#allocation2 + $0x80] sm:$0xf]
        %v439 = vld [vmem:[#allocation2 + $0x84] sm:$0xf]
        %v440 = vld [vmem:[#allocation2 + $0x88] sm:$0xf]
        %v441 = vld [vmem:[#allocation2 + $0x8c] sm:$0xf]
        %v442 = vld [vmem:[#allocation2 + $0x90] sm:$0xf]
        %v443 = vld [vmem:[#allocation2 + $0x94] sm:$0xf]
        %v444 = vld [vmem:[#allocation2 + $0x98] sm:$0xf]
        %v445 = vld [vmem:[#allocation2 + $0x9c] sm:$0xf]
        %v446 = vld [vmem:[#allocation2 + $0xa0] sm:$0xf]
        %v447 = vld [vmem:[#allocation2 + $0xa4] sm:$0xf]
        %v448 = vld [vmem:[#allocation2 + $0xa8] sm:$0xf]
        %v449 = vld [vmem:[#allocation2 + $0xac] sm:$0xf]
        %v450 = vld [vmem:[#allocation2 + $0xb0] sm:$0xf]
        %v451 = vld [vmem:[#allocation2 + $0xb4] sm:$0xf]
        %v452 = vld [vmem:[#allocation2 + $0xb8] sm:$0xf]
        %v453 = vld [vmem:[#allocation2 + $0xbc] sm:$0xf]
        %v454 = vld [vmem:[#allocation2 + $0xc0] sm:$0xf]
        %v455 = vld [vmem:[#allocation2 + $0xc4] sm:$0xf]
        %v456 = vld [vmem:[#allocation2 + $0xc8] sm:$0xf]
        %v457 = vld [vmem:[#allocation2 + $0xcc] sm:$0xf]
        %v458 = vld [vmem:[#allocation2 + $0xd0] sm:$0xf]
        %v459 = vld [vmem:[#allocation2 + $0xd4] sm:$0xf]
        %v460 = vld [vmem:[#allocation2 + $0xd8] sm:$0xf]
        %v461 = vld [vmem:[#allocation2 + $0xdc] sm:$0xf]
        %v462 = vld [vmem:[#allocation2 + $0xe0] sm:$0xf]
        %v463 = vld [vmem:[#allocation2 + $0xe4] sm:$0xf]
        %v464 = vld [vmem:[#allocation2 + $0xe8] sm:$0xf]
        %v465 = vld [vmem:[#allocation2 + $0xec] sm:$0xf]
        %v466 = vld [vmem:[#allocation2 + $0xf0] sm:$0xf]
        %v467 = vld [vmem:[#allocation2 + $0xf4] sm:$0xf]
        %v468 = vld [vmem:[#allocation2 + $0xf8] sm:$0xf]
        %v469 = vld [vmem:[#allocation2 + $0xfc] sm:$0xf]
        %v470 = vld [vmem:[%s4] ss:$4 sm:$0x3]
        %s471 = scalar_lea.vmem %s4, 1
        %v472 = vld [vmem:[%s471] ss:$4 sm:$0x3]
        %s473 = scalar_lea.vmem %s4, 2
        %v474 = vld [vmem:[%s473] ss:$4 sm:$0x3]
        %v476 = vlaneseq
        %v477 = vshrl.u32 %v476, 7
        %v478 = vsub.s32 0, %v477
        %v479 = vrot.slane %v470, %v478
        %v480 = vlaneseq
        %v481 = vshrl.u32 %v480, 7
        %v482 = vsub.s32 1, %v481
        %v483 = vrot.slane %v470, %v482
        %v488 = vunpack.c.l.b16 %v339
        %v489 = vunpack.c.h.b16 %v339
        %v490 = vunpack.c.l.b16 %v340
        %v491 = vunpack.c.h.b16 %v340
        %v492 = vpack.c.b16 %v490, %v488
        %v493 = vpack.c.b16 %v491, %v489
        %vm496 = vcmask 130048
        %v498 = vsel %vm496, %v307, 0
        %v501 = vsel %vm496, %v308, 0
        %v504 = vsel %vm496, %v309, 0
        %v507 = vsel %vm496, %v310, 0
        %v510 = vsel %vm496, %v311, 0
        %v513 = vsel %vm496, %v312, 0
        %v516 = vsel %vm496, %v313, 0
        %v519 = vsel %vm496, %v314, 0
        %521 = vmatprep.subr.bf16.mxu0 0
        %522 = vmatpush1.bf16.msra.mxu0 0
        %523 = vmatprep.subr.bf16.mxu0 0
        %524 = vmatpush1.bf16.msra.mxu0 0
        %525 = vmatprep.subr.bf16.mxu0 0
        %526 = vmatpush1.bf16.msra.mxu0 0
        %527 = vmatprep.subr.bf16.mxu0 0
        %528 = vmatpush1.bf16.msra.mxu0 0
        %529 = vmatprep.subr.bf16.mxu0 0
        %530 = vmatpush1.bf16.msra.mxu0 0
        %531 = vmatprep.subr.bf16.mxu0 0
        %532 = vmatpush1.bf16.msra.mxu0 0
        %533 = vmatprep.subr.bf16.mxu0 0
        %534 = vmatpush1.bf16.msra.mxu0 0
        %535 = vmatprep.subr.bf16.mxu0 %v493
        %536 = vmatpush1.bf16.msra.mxu0 %v492
        %537 = vmatprep.subr.bf16.mxu0 0
        %538 = vmatpush2.bf16.msra.mxu0 0
        %539 = vmatprep.subr.bf16.mxu0 0
        %540 = vmatpush2.bf16.msra.mxu0 0
        %541 = vmatprep.subr.bf16.mxu0 0
        %542 = vmatpush2.bf16.msra.mxu0 0
        %543 = vmatprep.subr.bf16.mxu0 0
        %544 = vmatpush2.bf16.msra.mxu0 0
        %545 = vmatprep.subr.bf16.mxu0 0
        %546 = vmatpush2.bf16.msra.mxu0 0
        %547 = vmatprep.subr.bf16.mxu0 0
        %548 = vmatpush2.bf16.msra.mxu0 0
        %549 = vmatprep.subr.bf16.mxu0 0
        %550 = vmatpush2.bf16.msra.mxu0 0
        %551 = vmatprep.subr.bf16.mxu0 0
        %552 = vmatpush2.bf16.msra.mxu0 0
        %553 = vmatprep.mubr.bf16.mxu0 0
        %554 = vmatmul.mubr.bf16.gmra.mxu0 %v498
        %v555 = vpop.f32.mrf.mxu0
        %v556 = vadd.f32 %v479, %v555
        %v557 = vpop.f32.mrf.mxu0
        %v558 = vadd.f32 %v483, %v557
        %v559 = vpop.f32.mrf.mxu0
        %v560 = vadd.f32 %v479, %v559
        %v561 = vpop.f32.mrf.mxu0
        %v562 = vadd.f32 %v483, %v561
        %563 = vmatprep.mubr.bf16.mxu0 0
        %564 = vmatmul.mubr.bf16.gmra.mxu0 %v501
        %v565 = vpop.f32.mrf.mxu0
        %v566 = vadd.f32 %v479, %v565
        %v567 = vpop.f32.mrf.mxu0
        %v568 = vadd.f32 %v483, %v567
        %v569 = vpop.f32.mrf.mxu0
        %v570 = vadd.f32 %v479, %v569
        %v571 = vpop.f32.mrf.mxu0
        %v572 = vadd.f32 %v483, %v571
        %573 = vmatprep.mubr.bf16.mxu0 0
        %574 = vmatmul.mubr.bf16.gmra.mxu0 %v504
        %v575 = vpop.f32.mrf.mxu0
        %v576 = vadd.f32 %v479, %v575
        %v577 = vpop.f32.mrf.mxu0
        %v578 = vadd.f32 %v483, %v577
        %v579 = vpop.f32.mrf.mxu0
        %v580 = vadd.f32 %v479, %v579
        %v581 = vpop.f32.mrf.mxu0
        %v582 = vadd.f32 %v483, %v581
        %583 = vmatprep.mubr.bf16.mxu0 0
        %584 = vmatmul.mubr.bf16.gmra.mxu0 %v507
        %v585 = vpop.f32.mrf.mxu0
        %v586 = vadd.f32 %v479, %v585
        %v587 = vpop.f32.mrf.mxu0
        %v588 = vadd.f32 %v483, %v587
        %v589 = vpop.f32.mrf.mxu0
        %v590 = vadd.f32 %v479, %v589
        %v591 = vpop.f32.mrf.mxu0
        %v592 = vadd.f32 %v483, %v591
        %593 = vmatprep.mubr.bf16.mxu0 0
        %594 = vmatmul.mubr.bf16.gmra.mxu0 %v510
        %v595 = vpop.f32.mrf.mxu0
        %v596 = vadd.f32 %v479, %v595
        %v597 = vpop.f32.mrf.mxu0
        %v598 = vadd.f32 %v483, %v597
        %v599 = vpop.f32.mrf.mxu0
        %v600 = vadd.f32 %v479, %v599
        %v601 = vpop.f32.mrf.mxu0
        %v602 = vadd.f32 %v483, %v601
        %603 = vmatprep.mubr.bf16.mxu0 0
        %604 = vmatmul.mubr.bf16.gmra.mxu0 %v513
        %v605 = vpop.f32.mrf.mxu0
        %v606 = vadd.f32 %v479, %v605
        %v607 = vpop.f32.mrf.mxu0
        %v608 = vadd.f32 %v483, %v607
        %v609 = vpop.f32.mrf.mxu0
        %v610 = vadd.f32 %v479, %v609
        %v611 = vpop.f32.mrf.mxu0
        %v612 = vadd.f32 %v483, %v611
        %613 = vmatprep.mubr.bf16.mxu0 0
        %614 = vmatmul.mubr.bf16.gmra.mxu0 %v516
        %v615 = vpop.f32.mrf.mxu0
        %v616 = vadd.f32 %v479, %v615
        %v617 = vpop.f32.mrf.mxu0
        %v618 = vadd.f32 %v483, %v617
        %v619 = vpop.f32.mrf.mxu0
        %v620 = vadd.f32 %v479, %v619
        %v621 = vpop.f32.mrf.mxu0
        %v622 = vadd.f32 %v483, %v621
        %623 = vmatprep.mubr.bf16.mxu0 0
        %624 = vmatmul.mubr.bf16.gmra.mxu0 %v519
        %v625 = vpop.f32.mrf.mxu0
        %v626 = vadd.f32 %v479, %v625
        %v627 = vpop.f32.mrf.mxu0
        %v628 = vadd.f32 %v483, %v627
        %v629 = vpop.f32.mrf.mxu0
        %v630 = vadd.f32 %v479, %v629
        %v631 = vpop.f32.mrf.mxu0
        %v632 = vadd.f32 %v483, %v631
        %633 = vdwg.mxu0
        %v634 = vmax.f32 %v556, 0.0
        %v635 = vmax.f32 %v558, 0.0
        %v636 = vmax.f32 %v560, 0.0
        %v637 = vmax.f32 %v562, 0.0
        %v638 = vmax.f32 %v566, 0.0
        %v639 = vmax.f32 %v568, 0.0
        %v640 = vmax.f32 %v570, 0.0
        %v641 = vmax.f32 %v572, 0.0
        %v642 = vmax.f32 %v576, 0.0
        %v643 = vmax.f32 %v578, 0.0
        %v644 = vmax.f32 %v580, 0.0
        %v645 = vmax.f32 %v582, 0.0
        %v646 = vmax.f32 %v586, 0.0
        %v647 = vmax.f32 %v588, 0.0
        %v648 = vmax.f32 %v590, 0.0
        %v649 = vmax.f32 %v592, 0.0
        %v650 = vmax.f32 %v596, 0.0
        %v651 = vmax.f32 %v598, 0.0
        %v652 = vmax.f32 %v600, 0.0
        %v653 = vmax.f32 %v602, 0.0
        %v654 = vmax.f32 %v606, 0.0
        %v655 = vmax.f32 %v608, 0.0
        %v656 = vmax.f32 %v610, 0.0
        %v657 = vmax.f32 %v612, 0.0
        %v658 = vmax.f32 %v616, 0.0
        %v659 = vmax.f32 %v618, 0.0
        %v660 = vmax.f32 %v620, 0.0
        %v661 = vmax.f32 %v622, 0.0
        %v662 = vmax.f32 %v626, 0.0
        %v663 = vmax.f32 %v628, 0.0
        %v664 = vmax.f32 %v630, 0.0
        %v665 = vmax.f32 %v632, 0.0
        %v666 = vpack.c.bf16 %v636, %v634
        %v667 = vpack.c.bf16 %v637, %v635
        %v668 = vpack.c.bf16 %v640, %v638
        %v669 = vpack.c.bf16 %v641, %v639
        %v670 = vpack.c.bf16 %v644, %v642
        %v671 = vpack.c.bf16 %v645, %v643
        %v672 = vpack.c.bf16 %v648, %v646
        %v673 = vpack.c.bf16 %v649, %v647
        %v674 = vpack.c.bf16 %v652, %v650
        %v675 = vpack.c.bf16 %v653, %v651
        %v676 = vpack.c.bf16 %v656, %v654
        %v677 = vpack.c.bf16 %v657, %v655
        %v678 = vpack.c.bf16 %v660, %v658
        %v679 = vpack.c.bf16 %v661, %v659
        %v680 = vpack.c.bf16 %v664, %v662
        %v681 = vpack.c.bf16 %v665, %v663
        %v683 = vlaneseq
        %v684 = vshrl.u32 %v683, 7
        %v685 = vsub.s32 0, %v684
        %v686 = vrot.slane %v472, %v685
        %v687 = vlaneseq
        %v688 = vshrl.u32 %v687, 7
        %v689 = vsub.s32 1, %v688
        %v690 = vrot.slane %v472, %v689
        %v725 = vunpack.c.l.b16 %v342
        %v726 = vunpack.c.h.b16 %v342
        %v727 = vunpack.c.l.b16 %v343
        %v728 = vunpack.c.h.b16 %v343
        %v729 = vunpack.c.l.b16 %v344
        %v730 = vunpack.c.h.b16 %v344
        %v731 = vunpack.c.l.b16 %v345
        %v732 = vunpack.c.h.b16 %v345
        %v733 = vunpack.c.l.b16 %v346
        %v734 = vunpack.c.h.b16 %v346
        %v735 = vunpack.c.l.b16 %v347
        %v736 = vunpack.c.h.b16 %v347
        %v737 = vunpack.c.l.b16 %v348
        %v738 = vunpack.c.h.b16 %v348
        %v739 = vunpack.c.l.b16 %v349
        %v740 = vunpack.c.h.b16 %v349
        %v741 = vunpack.c.l.b16 %v350
        %v742 = vunpack.c.h.b16 %v350
        %v743 = vunpack.c.l.b16 %v351
        %v744 = vunpack.c.h.b16 %v351
        %v745 = vunpack.c.l.b16 %v352
        %v746 = vunpack.c.h.b16 %v352
        %v747 = vunpack.c.l.b16 %v353
        %v748 = vunpack.c.h.b16 %v353
        %v749 = vunpack.c.l.b16 %v354
        %v750 = vunpack.c.h.b16 %v354
        %v751 = vunpack.c.l.b16 %v355
        %v752 = vunpack.c.h.b16 %v355
        %v753 = vunpack.c.l.b16 %v356
        %v754 = vunpack.c.h.b16 %v356
        %v755 = vunpack.c.l.b16 %v357
        %v756 = vunpack.c.h.b16 %v357
        %v757 = vunpack.c.l.b16 %v358
        %v758 = vunpack.c.h.b16 %v358
        %v759 = vunpack.c.l.b16 %v359
        %v760 = vunpack.c.h.b16 %v359
        %v761 = vunpack.c.l.b16 %v360
        %v762 = vunpack.c.h.b16 %v360
        %v763 = vunpack.c.l.b16 %v361
        %v764 = vunpack.c.h.b16 %v361
        %v765 = vunpack.c.l.b16 %v362
        %v766 = vunpack.c.h.b16 %v362
        %v767 = vunpack.c.l.b16 %v363
        %v768 = vunpack.c.h.b16 %v363
        %v769 = vunpack.c.l.b16 %v364
        %v770 = vunpack.c.h.b16 %v364
        %v771 = vunpack.c.l.b16 %v365
        %v772 = vunpack.c.h.b16 %v365
        %v773 = vunpack.c.l.b16 %v366
        %v774 = vunpack.c.h.b16 %v366
        %v775 = vunpack.c.l.b16 %v367
        %v776 = vunpack.c.h.b16 %v367
        %v777 = vunpack.c.l.b16 %v368
        %v778 = vunpack.c.h.b16 %v368
        %v779 = vunpack.c.l.b16 %v369
        %v780 = vunpack.c.h.b16 %v369
        %v781 = vunpack.c.l.b16 %v370
        %v782 = vunpack.c.h.b16 %v370
        %v783 = vunpack.c.l.b16 %v371
        %v784 = vunpack.c.h.b16 %v371
        %v785 = vunpack.c.l.b16 %v372
        %v786 = vunpack.c.h.b16 %v372
        %v787 = vunpack.c.l.b16 %v373
        %v788 = vunpack.c.h.b16 %v373
        %v789 = vpack.c.b16 %v727, %v725
        %v790 = vpack.c.b16 %v728, %v726
        %v791 = vpack.c.b16 %v731, %v729
        %v792 = vpack.c.b16 %v732, %v730
        %v793 = vpack.c.b16 %v735, %v733
        %v794 = vpack.c.b16 %v736, %v734
        %v795 = vpack.c.b16 %v739, %v737
        %v796 = vpack.c.b16 %v740, %v738
        %v797 = vpack.c.b16 %v743, %v741
        %v798 = vpack.c.b16 %v744, %v742
        %v799 = vpack.c.b16 %v747, %v745
        %v800 = vpack.c.b16 %v748, %v746
        %v801 = vpack.c.b16 %v751, %v749
        %v802 = vpack.c.b16 %v752, %v750
        %v803 = vpack.c.b16 %v755, %v753
        %v804 = vpack.c.b16 %v756, %v754
        %v805 = vpack.c.b16 %v759, %v757
        %v806 = vpack.c.b16 %v760, %v758
        %v807 = vpack.c.b16 %v763, %v761
        %v808 = vpack.c.b16 %v764, %v762
        %v809 = vpack.c.b16 %v767, %v765
        %v810 = vpack.c.b16 %v768, %v766
        %v811 = vpack.c.b16 %v771, %v769
        %v812 = vpack.c.b16 %v772, %v770
        %v813 = vpack.c.b16 %v775, %v773
        %v814 = vpack.c.b16 %v776, %v774
        %v815 = vpack.c.b16 %v779, %v777
        %v816 = vpack.c.b16 %v780, %v778
        %v817 = vpack.c.b16 %v783, %v781
        %v818 = vpack.c.b16 %v784, %v782
        %v819 = vpack.c.b16 %v787, %v785
        %v820 = vpack.c.b16 %v788, %v786
        %853 = vmatprep.subr.bf16.mxu0 %v804
        %854 = vmatpush1.bf16.msra.mxu0 %v803
        %855 = vmatprep.subr.bf16.mxu0 %v802
        %856 = vmatpush1.bf16.msra.mxu0 %v801
        %857 = vmatprep.subr.bf16.mxu0 %v800
        %858 = vmatpush1.bf16.msra.mxu0 %v799
        %859 = vmatprep.subr.bf16.mxu0 %v798
        %860 = vmatpush1.bf16.msra.mxu0 %v797
        %861 = vmatprep.subr.bf16.mxu0 %v796
        %862 = vmatpush1.bf16.msra.mxu0 %v795
        %863 = vmatprep.subr.bf16.mxu0 %v794
        %864 = vmatpush1.bf16.msra.mxu0 %v793
        %865 = vmatprep.subr.bf16.mxu0 %v792
        %866 = vmatpush1.bf16.msra.mxu0 %v791
        %867 = vmatprep.subr.bf16.mxu0 %v790
        %868 = vmatpush1.bf16.msra.mxu0 %v789
        %869 = vmatprep.subr.bf16.mxu0 %v820
        %870 = vmatpush2.bf16.msra.mxu0 %v819
        %871 = vmatprep.subr.bf16.mxu0 %v818
        %872 = vmatpush2.bf16.msra.mxu0 %v817
        %873 = vmatprep.subr.bf16.mxu0 %v816
        %874 = vmatpush2.bf16.msra.mxu0 %v815
        %875 = vmatprep.subr.bf16.mxu0 %v814
        %876 = vmatpush2.bf16.msra.mxu0 %v813
        %877 = vmatprep.subr.bf16.mxu0 %v812
        %878 = vmatpush2.bf16.msra.mxu0 %v811
        %879 = vmatprep.subr.bf16.mxu0 %v810
        %880 = vmatpush2.bf16.msra.mxu0 %v809
        %881 = vmatprep.subr.bf16.mxu0 %v808
        %882 = vmatpush2.bf16.msra.mxu0 %v807
        %883 = vmatprep.subr.bf16.mxu0 %v806
        %884 = vmatpush2.bf16.msra.mxu0 %v805
        %885 = vmatprep.mubr.bf16.mxu0 %v667
        %886 = vmatmul.mubr.bf16.gmra.mxu0 %v666
        %v887 = vpop.f32.mrf.mxu0
        %v888 = vadd.f32 %v686, %v887
        %v889 = vpop.f32.mrf.mxu0
        %v890 = vadd.f32 %v690, %v889
        %v891 = vpop.f32.mrf.mxu0
        %v892 = vadd.f32 %v686, %v891
        %v893 = vpop.f32.mrf.mxu0
        %v894 = vadd.f32 %v690, %v893
        %895 = vmatprep.mubr.bf16.mxu0 %v669
        %896 = vmatmul.mubr.bf16.gmra.mxu0 %v668
        %v897 = vpop.f32.mrf.mxu0
        %v898 = vadd.f32 %v686, %v897
        %v899 = vpop.f32.mrf.mxu0
        %v900 = vadd.f32 %v690, %v899
        %v901 = vpop.f32.mrf.mxu0
        %v902 = vadd.f32 %v686, %v901
        %v903 = vpop.f32.mrf.mxu0
        %v904 = vadd.f32 %v690, %v903
        %905 = vmatprep.mubr.bf16.mxu0 %v671
        %906 = vmatmul.mubr.bf16.gmra.mxu0 %v670
        %v907 = vpop.f32.mrf.mxu0
        %v908 = vadd.f32 %v686, %v907
        %v909 = vpop.f32.mrf.mxu0
        %v910 = vadd.f32 %v690, %v909
        %v911 = vpop.f32.mrf.mxu0
        %v912 = vadd.f32 %v686, %v911
        %v913 = vpop.f32.mrf.mxu0
        %v914 = vadd.f32 %v690, %v913
        %915 = vmatprep.mubr.bf16.mxu0 %v673
        %916 = vmatmul.mubr.bf16.gmra.mxu0 %v672
        %v917 = vpop.f32.mrf.mxu0
        %v918 = vadd.f32 %v686, %v917
        %v919 = vpop.f32.mrf.mxu0
        %v920 = vadd.f32 %v690, %v919
        %v921 = vpop.f32.mrf.mxu0
        %v922 = vadd.f32 %v686, %v921
        %v923 = vpop.f32.mrf.mxu0
        %v924 = vadd.f32 %v690, %v923
        %925 = vmatprep.mubr.bf16.mxu0 %v675
        %926 = vmatmul.mubr.bf16.gmra.mxu0 %v674
        %v927 = vpop.f32.mrf.mxu0
        %v928 = vadd.f32 %v686, %v927
        %v929 = vpop.f32.mrf.mxu0
        %v930 = vadd.f32 %v690, %v929
        %v931 = vpop.f32.mrf.mxu0
        %v932 = vadd.f32 %v686, %v931
        %v933 = vpop.f32.mrf.mxu0
        %v934 = vadd.f32 %v690, %v933
        %935 = vmatprep.mubr.bf16.mxu0 %v677
        %936 = vmatmul.mubr.bf16.gmra.mxu0 %v676
        %v937 = vpop.f32.mrf.mxu0
        %v938 = vadd.f32 %v686, %v937
        %v939 = vpop.f32.mrf.mxu0
        %v940 = vadd.f32 %v690, %v939
        %v941 = vpop.f32.mrf.mxu0
        %v942 = vadd.f32 %v686, %v941
        %v943 = vpop.f32.mrf.mxu0
        %v944 = vadd.f32 %v690, %v943
        %945 = vmatprep.mubr.bf16.mxu0 %v679
        %946 = vmatmul.mubr.bf16.gmra.mxu0 %v678
        %v947 = vpop.f32.mrf.mxu0
        %v948 = vadd.f32 %v686, %v947
        %v949 = vpop.f32.mrf.mxu0
        %v950 = vadd.f32 %v690, %v949
        %v951 = vpop.f32.mrf.mxu0
        %v952 = vadd.f32 %v686, %v951
        %v953 = vpop.f32.mrf.mxu0
        %v954 = vadd.f32 %v690, %v953
        %955 = vmatprep.mubr.bf16.mxu0 %v681
        %956 = vmatmul.mubr.bf16.gmra.mxu0 %v680
        %v957 = vpop.f32.mrf.mxu0
        %v958 = vadd.f32 %v686, %v957
        %v959 = vpop.f32.mrf.mxu0
        %v960 = vadd.f32 %v690, %v959
        %v961 = vpop.f32.mrf.mxu0
        %v962 = vadd.f32 %v686, %v961
        %v963 = vpop.f32.mrf.mxu0
        %v964 = vadd.f32 %v690, %v963
        %965 = vdwg.mxu0
        %v966 = vmax.f32 %v888, 0.0
        %v967 = vmax.f32 %v890, 0.0
        %v968 = vmax.f32 %v892, 0.0
        %v969 = vmax.f32 %v894, 0.0
        %v970 = vmax.f32 %v898, 0.0
        %v971 = vmax.f32 %v900, 0.0
        %v972 = vmax.f32 %v902, 0.0
        %v973 = vmax.f32 %v904, 0.0
        %v974 = vmax.f32 %v908, 0.0
        %v975 = vmax.f32 %v910, 0.0
        %v976 = vmax.f32 %v912, 0.0
        %v977 = vmax.f32 %v914, 0.0
        %v978 = vmax.f32 %v918, 0.0
        %v979 = vmax.f32 %v920, 0.0
        %v980 = vmax.f32 %v922, 0.0
        %v981 = vmax.f32 %v924, 0.0
        %v982 = vmax.f32 %v928, 0.0
        %v983 = vmax.f32 %v930, 0.0
        %v984 = vmax.f32 %v932, 0.0
        %v985 = vmax.f32 %v934, 0.0
        %v986 = vmax.f32 %v938, 0.0
        %v987 = vmax.f32 %v940, 0.0
        %v988 = vmax.f32 %v942, 0.0
        %v989 = vmax.f32 %v944, 0.0
        %v990 = vmax.f32 %v948, 0.0
        %v991 = vmax.f32 %v950, 0.0
        %v992 = vmax.f32 %v952, 0.0
        %v993 = vmax.f32 %v954, 0.0
        %v994 = vmax.f32 %v958, 0.0
        %v995 = vmax.f32 %v960, 0.0
        %v996 = vmax.f32 %v962, 0.0
        %v997 = vmax.f32 %v964, 0.0
        %v998 = vpack.c.bf16 %v968, %v966
        %v999 = vpack.c.bf16 %v969, %v967
        %v1000 = vpack.c.bf16 %v972, %v970
        %v1001 = vpack.c.bf16 %v973, %v971
        %v1002 = vpack.c.bf16 %v976, %v974
        %v1003 = vpack.c.bf16 %v977, %v975
        %v1004 = vpack.c.bf16 %v980, %v978
        %v1005 = vpack.c.bf16 %v981, %v979
        %v1006 = vpack.c.bf16 %v984, %v982
        %v1007 = vpack.c.bf16 %v985, %v983
        %v1008 = vpack.c.bf16 %v988, %v986
        %v1009 = vpack.c.bf16 %v989, %v987
        %v1010 = vpack.c.bf16 %v992, %v990
        %v1011 = vpack.c.bf16 %v993, %v991
        %v1012 = vpack.c.bf16 %v996, %v994
        %v1013 = vpack.c.bf16 %v997, %v995
        %v1015 = vunpack.c.l.b16 %v341
        %v1016 = vunpack.c.h.b16 %v341
        %v1017 = vpack.c.b16 %v1015, %v1015
        %v1018 = vpack.c.b16 %v1016, %v1016
        %vm1019 = vcmask 64512
        %v1021 = vsel %vm1019, %v331, 0
        %v1024 = vsel %vm1019, %v332, 0
        %v1027 = vsel %vm1019, %v333, 0
        %v1030 = vsel %vm1019, %v334, 0
        %v1033 = vsel %vm1019, %v335, 0
        %v1036 = vsel %vm1019, %v336, 0
        %v1039 = vsel %vm1019, %v337, 0
        %v1042 = vsel %vm1019, %v338, 0
        %vm1044 = vcmask 1043456
        %v1046 = vsel %vm1044, %v1017, 0
        %v1049 = vsel %vm1044, %v1018, 0
        %1051 = vmatprep.subr.bf16.mxu0 0
        %1052 = vmatpush1.bf16.msra.mxu0 0
        %1053 = vmatprep.subr.bf16.mxu0 0
        %1054 = vmatpush1.bf16.msra.mxu0 0
        %1055 = vmatprep.subr.bf16.mxu0 0
        %1056 = vmatpush1.bf16.msra.mxu0 0
        %1057 = vmatprep.subr.bf16.mxu0 0
        %1058 = vmatpush1.bf16.msra.mxu0 0
        %1059 = vmatprep.subr.bf16.mxu0 0
        %1060 = vmatpush1.bf16.msra.mxu0 0
        %1061 = vmatprep.subr.bf16.mxu0 0
        %1062 = vmatpush1.bf16.msra.mxu0 0
        %1063 = vmatprep.subr.bf16.mxu0 0
        %1064 = vmatpush1.bf16.msra.mxu0 0
        %1065 = vmatprep.subr.bf16.mxu0 %v1049
        %1066 = vmatpush1.bf16.msra.mxu0 %v1046
        %1067 = vmatprep.subr.bf16.mxu0 0
        %1068 = vmatpush2.bf16.msra.mxu0 0
        %1069 = vmatprep.subr.bf16.mxu0 0
        %1070 = vmatpush2.bf16.msra.mxu0 0
        %1071 = vmatprep.subr.bf16.mxu0 0
        %1072 = vmatpush2.bf16.msra.mxu0 0
        %1073 = vmatprep.subr.bf16.mxu0 0
        %1074 = vmatpush2.bf16.msra.mxu0 0
        %1075 = vmatprep.subr.bf16.mxu0 0
        %1076 = vmatpush2.bf16.msra.mxu0 0
        %1077 = vmatprep.subr.bf16.mxu0 0
        %1078 = vmatpush2.bf16.msra.mxu0 0
        %1079 = vmatprep.subr.bf16.mxu0 0
        %1080 = vmatpush2.bf16.msra.mxu0 0
        %1081 = vmatprep.subr.bf16.mxu0 0
        %1082 = vmatpush2.bf16.msra.mxu0 0
        %1083 = vmatprep.mubr.bf16.mxu0 0
        %1084 = vmatmul.mubr.bf16.gmra.mxu0 %v1021
        %v1085 = vpop.f32.mrf.mxu0
        %v1086 = vadd.f32 0.0, %v1085
        %v1087 = vpop.f32.mrf.mxu0
        %v1088 = vadd.f32 0.0, %v1087
        %v1089 = vpop.f32.mrf.mxu0
        %v1090 = vadd.f32 0.0, %v1089
        %v1091 = vpop.f32.mrf.mxu0
        %v1092 = vadd.f32 0.0, %v1091
        %1093 = vmatprep.mubr.bf16.mxu0 0
        %1094 = vmatmul.mubr.bf16.gmra.mxu0 %v1024
        %v1095 = vpop.f32.mrf.mxu0
        %v1096 = vadd.f32 0.0, %v1095
        %v1097 = vpop.f32.mrf.mxu0
        %v1098 = vadd.f32 0.0, %v1097
        %v1099 = vpop.f32.mrf.mxu0
        %v1100 = vadd.f32 0.0, %v1099
        %v1101 = vpop.f32.mrf.mxu0
        %v1102 = vadd.f32 0.0, %v1101
        %1103 = vmatprep.mubr.bf16.mxu0 0
        %1104 = vmatmul.mubr.bf16.gmra.mxu0 %v1027
        %v1105 = vpop.f32.mrf.mxu0
        %v1106 = vadd.f32 0.0, %v1105
        %v1107 = vpop.f32.mrf.mxu0
        %v1108 = vadd.f32 0.0, %v1107
        %v1109 = vpop.f32.mrf.mxu0
        %v1110 = vadd.f32 0.0, %v1109
        %v1111 = vpop.f32.mrf.mxu0
        %v1112 = vadd.f32 0.0, %v1111
        %1113 = vmatprep.mubr.bf16.mxu0 0
        %1114 = vmatmul.mubr.bf16.gmra.mxu0 %v1030
        %v1115 = vpop.f32.mrf.mxu0
        %v1116 = vadd.f32 0.0, %v1115
        %v1117 = vpop.f32.mrf.mxu0
        %v1118 = vadd.f32 0.0, %v1117
        %v1119 = vpop.f32.mrf.mxu0
        %v1120 = vadd.f32 0.0, %v1119
        %v1121 = vpop.f32.mrf.mxu0
        %v1122 = vadd.f32 0.0, %v1121
        %1123 = vmatprep.mubr.bf16.mxu0 0
        %1124 = vmatmul.mubr.bf16.gmra.mxu0 %v1033
        %v1125 = vpop.f32.mrf.mxu0
        %v1126 = vadd.f32 0.0, %v1125
        %v1127 = vpop.f32.mrf.mxu0
        %v1128 = vadd.f32 0.0, %v1127
        %v1129 = vpop.f32.mrf.mxu0
        %v1130 = vadd.f32 0.0, %v1129
        %v1131 = vpop.f32.mrf.mxu0
        %v1132 = vadd.f32 0.0, %v1131
        %1133 = vmatprep.mubr.bf16.mxu0 0
        %1134 = vmatmul.mubr.bf16.gmra.mxu0 %v1036
        %v1135 = vpop.f32.mrf.mxu0
        %v1136 = vadd.f32 0.0, %v1135
        %v1137 = vpop.f32.mrf.mxu0
        %v1138 = vadd.f32 0.0, %v1137
        %v1139 = vpop.f32.mrf.mxu0
        %v1140 = vadd.f32 0.0, %v1139
        %v1141 = vpop.f32.mrf.mxu0
        %v1142 = vadd.f32 0.0, %v1141
        %1143 = vmatprep.mubr.bf16.mxu0 0
        %1144 = vmatmul.mubr.bf16.gmra.mxu0 %v1039
        %v1145 = vpop.f32.mrf.mxu0
        %v1146 = vadd.f32 0.0, %v1145
        %v1147 = vpop.f32.mrf.mxu0
        %v1148 = vadd.f32 0.0, %v1147
        %v1149 = vpop.f32.mrf.mxu0
        %v1150 = vadd.f32 0.0, %v1149
        %v1151 = vpop.f32.mrf.mxu0
        %v1152 = vadd.f32 0.0, %v1151
        %1153 = vmatprep.mubr.bf16.mxu0 0
        %1154 = vmatmul.mubr.bf16.gmra.mxu0 %v1042
        %v1155 = vpop.f32.mrf.mxu0
        %v1156 = vadd.f32 0.0, %v1155
        %v1157 = vpop.f32.mrf.mxu0
        %v1158 = vadd.f32 0.0, %v1157
        %v1159 = vpop.f32.mrf.mxu0
        %v1160 = vadd.f32 0.0, %v1159
        %v1161 = vpop.f32.mrf.mxu0
        %v1162 = vadd.f32 0.0, %v1161
        %1163 = vdwg.mxu0
        %v1196 = vunpack.c.l.b16 %v374
        %v1197 = vunpack.c.h.b16 %v374
        %v1198 = vunpack.c.l.b16 %v375
        %v1199 = vunpack.c.h.b16 %v375
        %v1200 = vunpack.c.l.b16 %v376
        %v1201 = vunpack.c.h.b16 %v376
        %v1202 = vunpack.c.l.b16 %v377
        %v1203 = vunpack.c.h.b16 %v377
        %v1204 = vunpack.c.l.b16 %v378
        %v1205 = vunpack.c.h.b16 %v378
        %v1206 = vunpack.c.l.b16 %v379
        %v1207 = vunpack.c.h.b16 %v379
        %v1208 = vunpack.c.l.b16 %v380
        %v1209 = vunpack.c.h.b16 %v380
        %v1210 = vunpack.c.l.b16 %v381
        %v1211 = vunpack.c.h.b16 %v381
        %v1212 = vunpack.c.l.b16 %v382
        %v1213 = vunpack.c.h.b16 %v382
        %v1214 = vunpack.c.l.b16 %v383
        %v1215 = vunpack.c.h.b16 %v383
        %v1216 = vunpack.c.l.b16 %v384
        %v1217 = vunpack.c.h.b16 %v384
        %v1218 = vunpack.c.l.b16 %v385
        %v1219 = vunpack.c.h.b16 %v385
        %v1220 = vunpack.c.l.b16 %v386
        %v1221 = vunpack.c.h.b16 %v386
        %v1222 = vunpack.c.l.b16 %v387
        %v1223 = vunpack.c.h.b16 %v387
        %v1224 = vunpack.c.l.b16 %v388
        %v1225 = vunpack.c.h.b16 %v388
        %v1226 = vunpack.c.l.b16 %v389
        %v1227 = vunpack.c.h.b16 %v389
        %v1228 = vunpack.c.l.b16 %v390
        %v1229 = vunpack.c.h.b16 %v390
        %v1230 = vunpack.c.l.b16 %v391
        %v1231 = vunpack.c.h.b16 %v391
        %v1232 = vunpack.c.l.b16 %v392
        %v1233 = vunpack.c.h.b16 %v392
        %v1234 = vunpack.c.l.b16 %v393
        %v1235 = vunpack.c.h.b16 %v393
        %v1236 = vunpack.c.l.b16 %v394
        %v1237 = vunpack.c.h.b16 %v394
        %v1238 = vunpack.c.l.b16 %v395
        %v1239 = vunpack.c.h.b16 %v395
        %v1240 = vunpack.c.l.b16 %v396
        %v1241 = vunpack.c.h.b16 %v396
        %v1242 = vunpack.c.l.b16 %v397
        %v1243 = vunpack.c.h.b16 %v397
        %v1244 = vunpack.c.l.b16 %v398
        %v1245 = vunpack.c.h.b16 %v398
        %v1246 = vunpack.c.l.b16 %v399
        %v1247 = vunpack.c.h.b16 %v399
        %v1248 = vunpack.c.l.b16 %v400
        %v1249 = vunpack.c.h.b16 %v400
        %v1250 = vunpack.c.l.b16 %v401
        %v1251 = vunpack.c.h.b16 %v401
        %v1252 = vunpack.c.l.b16 %v402
        %v1253 = vunpack.c.h.b16 %v402
        %v1254 = vunpack.c.l.b16 %v403
        %v1255 = vunpack.c.h.b16 %v403
        %v1256 = vunpack.c.l.b16 %v404
        %v1257 = vunpack.c.h.b16 %v404
        %v1258 = vunpack.c.l.b16 %v405
        %v1259 = vunpack.c.h.b16 %v405
        %v1260 = vpack.c.b16 %v1198, %v1196
        %v1261 = vpack.c.b16 %v1199, %v1197
        %v1262 = vpack.c.b16 %v1202, %v1200
        %v1263 = vpack.c.b16 %v1203, %v1201
        %v1264 = vpack.c.b16 %v1206, %v1204
        %v1265 = vpack.c.b16 %v1207, %v1205
        %v1266 = vpack.c.b16 %v1210, %v1208
        %v1267 = vpack.c.b16 %v1211, %v1209
        %v1268 = vpack.c.b16 %v1214, %v1212
        %v1269 = vpack.c.b16 %v1215, %v1213
        %v1270 = vpack.c.b16 %v1218, %v1216
        %v1271 = vpack.c.b16 %v1219, %v1217
        %v1272 = vpack.c.b16 %v1222, %v1220
        %v1273 = vpack.c.b16 %v1223, %v1221
        %v1274 = vpack.c.b16 %v1226, %v1224
        %v1275 = vpack.c.b16 %v1227, %v1225
        %v1276 = vpack.c.b16 %v1230, %v1228
        %v1277 = vpack.c.b16 %v1231, %v1229
        %v1278 = vpack.c.b16 %v1234, %v1232
        %v1279 = vpack.c.b16 %v1235, %v1233
        %v1280 = vpack.c.b16 %v1238, %v1236
        %v1281 = vpack.c.b16 %v1239, %v1237
        %v1282 = vpack.c.b16 %v1242, %v1240
        %v1283 = vpack.c.b16 %v1243, %v1241
        %v1284 = vpack.c.b16 %v1246, %v1244
        %v1285 = vpack.c.b16 %v1247, %v1245
        %v1286 = vpack.c.b16 %v1250, %v1248
        %v1287 = vpack.c.b16 %v1251, %v1249
        %v1288 = vpack.c.b16 %v1254, %v1252
        %v1289 = vpack.c.b16 %v1255, %v1253
        %v1290 = vpack.c.b16 %v1258, %v1256
        %v1291 = vpack.c.b16 %v1259, %v1257
        %1324 = vmatprep.subr.bf16.mxu0 %v1275
        %1325 = vmatpush1.bf16.msra.mxu0 %v1274
        %1326 = vmatprep.subr.bf16.mxu0 %v1273
        %1327 = vmatpush1.bf16.msra.mxu0 %v1272
        %1328 = vmatprep.subr.bf16.mxu0 %v1271
        %1329 = vmatpush1.bf16.msra.mxu0 %v1270
        %1330 = vmatprep.subr.bf16.mxu0 %v1269
        %1331 = vmatpush1.bf16.msra.mxu0 %v1268
        %1332 = vmatprep.subr.bf16.mxu0 %v1267
        %1333 = vmatpush1.bf16.msra.mxu0 %v1266
        %1334 = vmatprep.subr.bf16.mxu0 %v1265
        %1335 = vmatpush1.bf16.msra.mxu0 %v1264
        %1336 = vmatprep.subr.bf16.mxu0 %v1263
        %1337 = vmatpush1.bf16.msra.mxu0 %v1262
        %1338 = vmatprep.subr.bf16.mxu0 %v1261
        %1339 = vmatpush1.bf16.msra.mxu0 %v1260
        %1340 = vmatprep.subr.bf16.mxu0 %v1291
        %1341 = vmatpush2.bf16.msra.mxu0 %v1290
        %1342 = vmatprep.subr.bf16.mxu0 %v1289
        %1343 = vmatpush2.bf16.msra.mxu0 %v1288
        %1344 = vmatprep.subr.bf16.mxu0 %v1287
        %1345 = vmatpush2.bf16.msra.mxu0 %v1286
        %1346 = vmatprep.subr.bf16.mxu0 %v1285
        %1347 = vmatpush2.bf16.msra.mxu0 %v1284
        %1348 = vmatprep.subr.bf16.mxu0 %v1283
        %1349 = vmatpush2.bf16.msra.mxu0 %v1282
        %1350 = vmatprep.subr.bf16.mxu0 %v1281
        %1351 = vmatpush2.bf16.msra.mxu0 %v1280
        %1352 = vmatprep.subr.bf16.mxu0 %v1279
        %1353 = vmatpush2.bf16.msra.mxu0 %v1278
        %1354 = vmatprep.subr.bf16.mxu0 %v1277
        %1355 = vmatpush2.bf16.msra.mxu0 %v1276
        %1356 = vmatprep.mubr.bf16.mxu0 %v999
        %1357 = vmatmul.mubr.bf16.gmra.mxu0 %v998
        %v1358 = vpop.f32.mrf.mxu0
        %v1359 = vadd.f32 %v1086, %v1358
        %v1360 = vpop.f32.mrf.mxu0
        %v1361 = vadd.f32 %v1088, %v1360
        %v1362 = vpop.f32.mrf.mxu0
        %v1363 = vadd.f32 %v1090, %v1362
        %v1364 = vpop.f32.mrf.mxu0
        %v1365 = vadd.f32 %v1092, %v1364
        %1366 = vmatprep.mubr.bf16.mxu0 %v1001
        %1367 = vmatmul.mubr.bf16.gmra.mxu0 %v1000
        %v1368 = vpop.f32.mrf.mxu0
        %v1369 = vadd.f32 %v1096, %v1368
        %v1370 = vpop.f32.mrf.mxu0
        %v1371 = vadd.f32 %v1098, %v1370
        %v1372 = vpop.f32.mrf.mxu0
        %v1373 = vadd.f32 %v1100, %v1372
        %v1374 = vpop.f32.mrf.mxu0
        %v1375 = vadd.f32 %v1102, %v1374
        %1376 = vmatprep.mubr.bf16.mxu0 %v1003
        %1377 = vmatmul.mubr.bf16.gmra.mxu0 %v1002
        %v1378 = vpop.f32.mrf.mxu0
        %v1379 = vadd.f32 %v1106, %v1378
        %v1380 = vpop.f32.mrf.mxu0
        %v1381 = vadd.f32 %v1108, %v1380
        %v1382 = vpop.f32.mrf.mxu0
        %v1383 = vadd.f32 %v1110, %v1382
        %v1384 = vpop.f32.mrf.mxu0
        %v1385 = vadd.f32 %v1112, %v1384
        %1386 = vmatprep.mubr.bf16.mxu0 %v1005
        %1387 = vmatmul.mubr.bf16.gmra.mxu0 %v1004
        %v1388 = vpop.f32.mrf.mxu0
        %v1389 = vadd.f32 %v1116, %v1388
        %v1390 = vpop.f32.mrf.mxu0
        %v1391 = vadd.f32 %v1118, %v1390
        %v1392 = vpop.f32.mrf.mxu0
        %v1393 = vadd.f32 %v1120, %v1392
        %v1394 = vpop.f32.mrf.mxu0
        %v1395 = vadd.f32 %v1122, %v1394
        %1396 = vmatprep.mubr.bf16.mxu0 %v1007
        %1397 = vmatmul.mubr.bf16.gmra.mxu0 %v1006
        %v1398 = vpop.f32.mrf.mxu0
        %v1399 = vadd.f32 %v1126, %v1398
        %v1400 = vpop.f32.mrf.mxu0
        %v1401 = vadd.f32 %v1128, %v1400
        %v1402 = vpop.f32.mrf.mxu0
        %v1403 = vadd.f32 %v1130, %v1402
        %v1404 = vpop.f32.mrf.mxu0
        %v1405 = vadd.f32 %v1132, %v1404
        %1406 = vmatprep.mubr.bf16.mxu0 %v1009
        %1407 = vmatmul.mubr.bf16.gmra.mxu0 %v1008
        %v1408 = vpop.f32.mrf.mxu0
        %v1409 = vadd.f32 %v1136, %v1408
        %v1410 = vpop.f32.mrf.mxu0
        %v1411 = vadd.f32 %v1138, %v1410
        %v1412 = vpop.f32.mrf.mxu0
        %v1413 = vadd.f32 %v1140, %v1412
        %v1414 = vpop.f32.mrf.mxu0
        %v1415 = vadd.f32 %v1142, %v1414
        %1416 = vmatprep.mubr.bf16.mxu0 %v1011
        %1417 = vmatmul.mubr.bf16.gmra.mxu0 %v1010
        %v1418 = vpop.f32.mrf.mxu0
        %v1419 = vadd.f32 %v1146, %v1418
        %v1420 = vpop.f32.mrf.mxu0
        %v1421 = vadd.f32 %v1148, %v1420
        %v1422 = vpop.f32.mrf.mxu0
        %v1423 = vadd.f32 %v1150, %v1422
        %v1424 = vpop.f32.mrf.mxu0
        %v1425 = vadd.f32 %v1152, %v1424
        %1426 = vmatprep.mubr.bf16.mxu0 %v1013
        %1427 = vmatmul.mubr.bf16.gmra.mxu0 %v1012
        %v1428 = vpop.f32.mrf.mxu0
        %v1429 = vadd.f32 %v1156, %v1428
        %v1430 = vpop.f32.mrf.mxu0
        %v1431 = vadd.f32 %v1158, %v1430
        %v1432 = vpop.f32.mrf.mxu0
        %v1433 = vadd.f32 %v1160, %v1432
        %v1434 = vpop.f32.mrf.mxu0
        %v1435 = vadd.f32 %v1162, %v1434
        %1436 = vdwg.mxu0
        %v1438 = vlaneseq
        %v1439 = vshrl.u32 %v1438, 7
        %v1440 = vsub.s32 0, %v1439
        %v1441 = vrot.slane %v474, %v1440
        %v1442 = vlaneseq
        %v1443 = vshrl.u32 %v1442, 7
        %v1444 = vsub.s32 1, %v1443
        %v1445 = vrot.slane %v474, %v1444
        %v1448 = vadd.f32 %v1359, %v1441
        %v1449 = vadd.f32 %v1361, %v1445
        %v1450 = vadd.f32 %v1363, %v1441
        %v1451 = vadd.f32 %v1365, %v1445
        %v1452 = vadd.f32 %v1369, %v1441
        %v1453 = vadd.f32 %v1371, %v1445
        %v1454 = vadd.f32 %v1373, %v1441
        %v1455 = vadd.f32 %v1375, %v1445
        %v1456 = vadd.f32 %v1379, %v1441
        %v1457 = vadd.f32 %v1381, %v1445
        %v1458 = vadd.f32 %v1383, %v1441
        %v1459 = vadd.f32 %v1385, %v1445
        %v1460 = vadd.f32 %v1389, %v1441
        %v1461 = vadd.f32 %v1391, %v1445
        %v1462 = vadd.f32 %v1393, %v1441
        %v1463 = vadd.f32 %v1395, %v1445
        %v1464 = vadd.f32 %v1399, %v1441
        %v1465 = vadd.f32 %v1401, %v1445
        %v1466 = vadd.f32 %v1403, %v1441
        %v1467 = vadd.f32 %v1405, %v1445
        %v1468 = vadd.f32 %v1409, %v1441
        %v1469 = vadd.f32 %v1411, %v1445
        %v1470 = vadd.f32 %v1413, %v1441
        %v1471 = vadd.f32 %v1415, %v1445
        %v1472 = vadd.f32 %v1419, %v1441
        %v1473 = vadd.f32 %v1421, %v1445
        %v1474 = vadd.f32 %v1423, %v1441
        %v1475 = vadd.f32 %v1425, %v1445
        %v1476 = vadd.f32 %v1429, %v1441
        %v1477 = vadd.f32 %v1431, %v1445
        %v1478 = vadd.f32 %v1433, %v1441
        %v1479 = vadd.f32 %v1435, %v1445
        %v1480 = vmax.f32 %v1448, 0.0
        %v1481 = vmax.f32 %v1449, 0.0
        %v1482 = vmax.f32 %v1450, 0.0
        %v1483 = vmax.f32 %v1451, 0.0
        %v1484 = vmax.f32 %v1452, 0.0
        %v1485 = vmax.f32 %v1453, 0.0
        %v1486 = vmax.f32 %v1454, 0.0
        %v1487 = vmax.f32 %v1455, 0.0
        %v1488 = vmax.f32 %v1456, 0.0
        %v1489 = vmax.f32 %v1457, 0.0
        %v1490 = vmax.f32 %v1458, 0.0
        %v1491 = vmax.f32 %v1459, 0.0
        %v1492 = vmax.f32 %v1460, 0.0
        %v1493 = vmax.f32 %v1461, 0.0
        %v1494 = vmax.f32 %v1462, 0.0
        %v1495 = vmax.f32 %v1463, 0.0
        %v1496 = vmax.f32 %v1464, 0.0
        %v1497 = vmax.f32 %v1465, 0.0
        %v1498 = vmax.f32 %v1466, 0.0
        %v1499 = vmax.f32 %v1467, 0.0
        %v1500 = vmax.f32 %v1468, 0.0
        %v1501 = vmax.f32 %v1469, 0.0
        %v1502 = vmax.f32 %v1470, 0.0
        %v1503 = vmax.f32 %v1471, 0.0
        %v1504 = vmax.f32 %v1472, 0.0
        %v1505 = vmax.f32 %v1473, 0.0
        %v1506 = vmax.f32 %v1474, 0.0
        %v1507 = vmax.f32 %v1475, 0.0
        %v1508 = vmax.f32 %v1476, 0.0
        %v1509 = vmax.f32 %v1477, 0.0
        %v1510 = vmax.f32 %v1478, 0.0
        %v1511 = vmax.f32 %v1479, 0.0
        %v1512 = vpack.c.bf16 %v1482, %v1480
        %v1513 = vpack.c.bf16 %v1483, %v1481
        %v1514 = vpack.c.bf16 %v1486, %v1484
        %v1515 = vpack.c.bf16 %v1487, %v1485
        %v1516 = vpack.c.bf16 %v1490, %v1488
        %v1517 = vpack.c.bf16 %v1491, %v1489
        %v1518 = vpack.c.bf16 %v1494, %v1492
        %v1519 = vpack.c.bf16 %v1495, %v1493
        %v1520 = vpack.c.bf16 %v1498, %v1496
        %v1521 = vpack.c.bf16 %v1499, %v1497
        %v1522 = vpack.c.bf16 %v1502, %v1500
        %v1523 = vpack.c.bf16 %v1503, %v1501
        %v1524 = vpack.c.bf16 %v1506, %v1504
        %v1525 = vpack.c.bf16 %v1507, %v1505
        %v1526 = vpack.c.bf16 %v1510, %v1508
        %v1527 = vpack.c.bf16 %v1511, %v1509
        %v1560 = vunpack.c.l.b16 %v438
        %v1561 = vunpack.c.l.b16 %v439
        %v1562 = vunpack.c.l.b16 %v440
        %v1563 = vunpack.c.l.b16 %v441
        %v1564 = vunpack.c.l.b16 %v442
        %v1565 = vunpack.c.l.b16 %v443
        %v1566 = vunpack.c.l.b16 %v444
        %v1567 = vunpack.c.l.b16 %v445
        %v1568 = vunpack.c.l.b16 %v446
        %v1569 = vunpack.c.l.b16 %v447
        %v1570 = vunpack.c.l.b16 %v448
        %v1571 = vunpack.c.l.b16 %v449
        %v1572 = vunpack.c.l.b16 %v450
        %v1573 = vunpack.c.l.b16 %v451
        %v1574 = vunpack.c.l.b16 %v452
        %v1575 = vunpack.c.l.b16 %v453
        %v1576 = vunpack.c.l.b16 %v454
        %v1577 = vunpack.c.l.b16 %v455
        %v1578 = vunpack.c.l.b16 %v456
        %v1579 = vunpack.c.l.b16 %v457
        %v1580 = vunpack.c.l.b16 %v458
        %v1581 = vunpack.c.l.b16 %v459
        %v1582 = vunpack.c.l.b16 %v460
        %v1583 = vunpack.c.l.b16 %v461
        %v1584 = vunpack.c.l.b16 %v462
        %v1585 = vunpack.c.l.b16 %v463
        %v1586 = vunpack.c.l.b16 %v464
        %v1587 = vunpack.c.l.b16 %v465
        %v1588 = vunpack.c.l.b16 %v466
        %v1589 = vunpack.c.l.b16 %v467
        %v1590 = vunpack.c.l.b16 %v468
        %v1591 = vunpack.c.l.b16 %v469
        %v1592 = vpack.c.b16 %v1561, %v1560
        %v1593 = vpack.c.b16 %v1563, %v1562
        %v1594 = vpack.c.b16 %v1565, %v1564
        %v1595 = vpack.c.b16 %v1567, %v1566
        %v1596 = vpack.c.b16 %v1569, %v1568
        %v1597 = vpack.c.b16 %v1571, %v1570
        %v1598 = vpack.c.b16 %v1573, %v1572
        %v1599 = vpack.c.b16 %v1575, %v1574
        %v1600 = vpack.c.b16 %v1577, %v1576
        %v1601 = vpack.c.b16 %v1579, %v1578
        %v1602 = vpack.c.b16 %v1581, %v1580
        %v1603 = vpack.c.b16 %v1583, %v1582
        %v1604 = vpack.c.b16 %v1585, %v1584
        %v1605 = vpack.c.b16 %v1587, %v1586
        %v1606 = vpack.c.b16 %v1589, %v1588
        %v1607 = vpack.c.b16 %v1591, %v1590
        %1624 = vmatprep.subr.bf16.mxu0 0
        %1625 = vmatpush1.bf16.msra.mxu0 %v1599
        %1626 = vmatprep.subr.bf16.mxu0 0
        %1627 = vmatpush1.bf16.msra.mxu0 %v1598
        %1628 = vmatprep.subr.bf16.mxu0 0
        %1629 = vmatpush1.bf16.msra.mxu0 %v1597
        %1630 = vmatprep.subr.bf16.mxu0 0
        %1631 = vmatpush1.bf16.msra.mxu0 %v1596
        %1632 = vmatprep.subr.bf16.mxu0 0
        %1633 = vmatpush1.bf16.msra.mxu0 %v1595
        %1634 = vmatprep.subr.bf16.mxu0 0
        %1635 = vmatpush1.bf16.msra.mxu0 %v1594
        %1636 = vmatprep.subr.bf16.mxu0 0
        %1637 = vmatpush1.bf16.msra.mxu0 %v1593
        %1638 = vmatprep.subr.bf16.mxu0 0
        %1639 = vmatpush1.bf16.msra.mxu0 %v1592
        %1640 = vmatprep.subr.bf16.mxu0 0
        %1641 = vmatpush2.bf16.msra.mxu0 %v1607
        %1642 = vmatprep.subr.bf16.mxu0 0
        %1643 = vmatpush2.bf16.msra.mxu0 %v1606
        %1644 = vmatprep.subr.bf16.mxu0 0
        %1645 = vmatpush2.bf16.msra.mxu0 %v1605
        %1646 = vmatprep.subr.bf16.mxu0 0
        %1647 = vmatpush2.bf16.msra.mxu0 %v1604
        %1648 = vmatprep.subr.bf16.mxu0 0
        %1649 = vmatpush2.bf16.msra.mxu0 %v1603
        %1650 = vmatprep.subr.bf16.mxu0 0
        %1651 = vmatpush2.bf16.msra.mxu0 %v1602
        %1652 = vmatprep.subr.bf16.mxu0 0
        %1653 = vmatpush2.bf16.msra.mxu0 %v1601
        %1654 = vmatprep.subr.bf16.mxu0 0
        %1655 = vmatpush2.bf16.msra.mxu0 %v1600
        %1656 = vmatprep.mubr.bf16.mxu0 %v1513
        %1657 = vmatmul.mubr.bf16.gmra.mxu0 %v1512
        %v1658 = vpop.f32.mrf.mxu0
        %v1659 = vadd.f32 0.0, %v1658
        %v1660 = vpop.f32.mrf.mxu0
        %v1661 = vpop.f32.mrf.mxu0
        %v1662 = vadd.f32 0.0, %v1661
        %v1663 = vpop.f32.mrf.mxu0
        %1664 = vmatprep.mubr.bf16.mxu0 %v1515
        %1665 = vmatmul.mubr.bf16.gmra.mxu0 %v1514
        %v1666 = vpop.f32.mrf.mxu0
        %v1667 = vadd.f32 0.0, %v1666
        %v1668 = vpop.f32.mrf.mxu0
        %v1669 = vpop.f32.mrf.mxu0
        %v1670 = vadd.f32 0.0, %v1669
        %v1671 = vpop.f32.mrf.mxu0
        %1672 = vmatprep.mubr.bf16.mxu0 %v1517
        %1673 = vmatmul.mubr.bf16.gmra.mxu0 %v1516
        %v1674 = vpop.f32.mrf.mxu0
        %v1675 = vadd.f32 0.0, %v1674
        %v1676 = vpop.f32.mrf.mxu0
        %v1677 = vpop.f32.mrf.mxu0
        %v1678 = vadd.f32 0.0, %v1677
        %v1679 = vpop.f32.mrf.mxu0
        %1680 = vmatprep.mubr.bf16.mxu0 %v1519
        %1681 = vmatmul.mubr.bf16.gmra.mxu0 %v1518
        %v1682 = vpop.f32.mrf.mxu0
        %v1683 = vadd.f32 0.0, %v1682
        %v1684 = vpop.f32.mrf.mxu0
        %v1685 = vpop.f32.mrf.mxu0
        %v1686 = vadd.f32 0.0, %v1685
        %v1687 = vpop.f32.mrf.mxu0
        %1688 = vmatprep.mubr.bf16.mxu0 %v1521
        %1689 = vmatmul.mubr.bf16.gmra.mxu0 %v1520
        %v1690 = vpop.f32.mrf.mxu0
        %v1691 = vadd.f32 0.0, %v1690
        %v1692 = vpop.f32.mrf.mxu0
        %v1693 = vpop.f32.mrf.mxu0
        %v1694 = vadd.f32 0.0, %v1693
        %v1695 = vpop.f32.mrf.mxu0
        %1696 = vmatprep.mubr.bf16.mxu0 %v1523
        %1697 = vmatmul.mubr.bf16.gmra.mxu0 %v1522
        %v1698 = vpop.f32.mrf.mxu0
        %v1699 = vadd.f32 0.0, %v1698
        %v1700 = vpop.f32.mrf.mxu0
        %v1701 = vpop.f32.mrf.mxu0
        %v1702 = vadd.f32 0.0, %v1701
        %v1703 = vpop.f32.mrf.mxu0
        %1704 = vmatprep.mubr.bf16.mxu0 %v1525
        %1705 = vmatmul.mubr.bf16.gmra.mxu0 %v1524
        %v1706 = vpop.f32.mrf.mxu0
        %v1707 = vadd.f32 0.0, %v1706
        %v1708 = vpop.f32.mrf.mxu0
        %v1709 = vpop.f32.mrf.mxu0
        %v1710 = vadd.f32 0.0, %v1709
        %v1711 = vpop.f32.mrf.mxu0
        %1712 = vmatprep.mubr.bf16.mxu0 %v1527
        %1713 = vmatmul.mubr.bf16.gmra.mxu0 %v1526
        %v1714 = vpop.f32.mrf.mxu0
        %v1715 = vadd.f32 0.0, %v1714
        %v1716 = vpop.f32.mrf.mxu0
        %v1717 = vpop.f32.mrf.mxu0
        %v1718 = vadd.f32 0.0, %v1717
        %v1719 = vpop.f32.mrf.mxu0
        %1720 = vdwg.mxu0
        %v1753 = vunpack.c.l.b16 %v406
        %v1754 = vunpack.c.l.b16 %v407
        %v1755 = vunpack.c.l.b16 %v408
        %v1756 = vunpack.c.l.b16 %v409
        %v1757 = vunpack.c.l.b16 %v410
        %v1758 = vunpack.c.l.b16 %v411
        %v1759 = vunpack.c.l.b16 %v412
        %v1760 = vunpack.c.l.b16 %v413
        %v1761 = vunpack.c.l.b16 %v414
        %v1762 = vunpack.c.l.b16 %v415
        %v1763 = vunpack.c.l.b16 %v416
        %v1764 = vunpack.c.l.b16 %v417
        %v1765 = vunpack.c.l.b16 %v418
        %v1766 = vunpack.c.l.b16 %v419
        %v1767 = vunpack.c.l.b16 %v420
        %v1768 = vunpack.c.l.b16 %v421
        %v1769 = vunpack.c.l.b16 %v422
        %v1770 = vunpack.c.l.b16 %v423
        %v1771 = vunpack.c.l.b16 %v424
        %v1772 = vunpack.c.l.b16 %v425
        %v1773 = vunpack.c.l.b16 %v426
        %v1774 = vunpack.c.l.b16 %v427
        %v1775 = vunpack.c.l.b16 %v428
        %v1776 = vunpack.c.l.b16 %v429
        %v1777 = vunpack.c.l.b16 %v430
        %v1778 = vunpack.c.l.b16 %v431
        %v1779 = vunpack.c.l.b16 %v432
        %v1780 = vunpack.c.l.b16 %v433
        %v1781 = vunpack.c.l.b16 %v434
        %v1782 = vunpack.c.l.b16 %v435
        %v1783 = vunpack.c.l.b16 %v436
        %v1784 = vunpack.c.l.b16 %v437
        %v1785 = vpack.c.b16 %v1754, %v1753
        %v1786 = vpack.c.b16 %v1756, %v1755
        %v1787 = vpack.c.b16 %v1758, %v1757
        %v1788 = vpack.c.b16 %v1760, %v1759
        %v1789 = vpack.c.b16 %v1762, %v1761
        %v1790 = vpack.c.b16 %v1764, %v1763
        %v1791 = vpack.c.b16 %v1766, %v1765
        %v1792 = vpack.c.b16 %v1768, %v1767
        %v1793 = vpack.c.b16 %v1770, %v1769
        %v1794 = vpack.c.b16 %v1772, %v1771
        %v1795 = vpack.c.b16 %v1774, %v1773
        %v1796 = vpack.c.b16 %v1776, %v1775
        %v1797 = vpack.c.b16 %v1778, %v1777
        %v1798 = vpack.c.b16 %v1780, %v1779
        %v1799 = vpack.c.b16 %v1782, %v1781
        %v1800 = vpack.c.b16 %v1784, %v1783
        %1817 = vmatprep.subr.bf16.mxu0 0
        %1818 = vmatpush1.bf16.msra.mxu0 %v1792
        %1819 = vmatprep.subr.bf16.mxu0 0
        %1820 = vmatpush1.bf16.msra.mxu0 %v1791
        %1821 = vmatprep.subr.bf16.mxu0 0
        %1822 = vmatpush1.bf16.msra.mxu0 %v1790
        %1823 = vmatprep.subr.bf16.mxu0 0
        %1824 = vmatpush1.bf16.msra.mxu0 %v1789
        %1825 = vmatprep.subr.bf16.mxu0 0
        %1826 = vmatpush1.bf16.msra.mxu0 %v1788
        %1827 = vmatprep.subr.bf16.mxu0 0
        %1828 = vmatpush1.bf16.msra.mxu0 %v1787
        %1829 = vmatprep.subr.bf16.mxu0 0
        %1830 = vmatpush1.bf16.msra.mxu0 %v1786
        %1831 = vmatprep.subr.bf16.mxu0 0
        %1832 = vmatpush1.bf16.msra.mxu0 %v1785
        %1833 = vmatprep.subr.bf16.mxu0 0
        %1834 = vmatpush2.bf16.msra.mxu0 %v1800
        %1835 = vmatprep.subr.bf16.mxu0 0
        %1836 = vmatpush2.bf16.msra.mxu0 %v1799
        %1837 = vmatprep.subr.bf16.mxu0 0
        %1838 = vmatpush2.bf16.msra.mxu0 %v1798
        %1839 = vmatprep.subr.bf16.mxu0 0
        %1840 = vmatpush2.bf16.msra.mxu0 %v1797
        %1841 = vmatprep.subr.bf16.mxu0 0
        %1842 = vmatpush2.bf16.msra.mxu0 %v1796
        %1843 = vmatprep.subr.bf16.mxu0 0
        %1844 = vmatpush2.bf16.msra.mxu0 %v1795
        %1845 = vmatprep.subr.bf16.mxu0 0
        %1846 = vmatpush2.bf16.msra.mxu0 %v1794
        %1847 = vmatprep.subr.bf16.mxu0 0
        %1848 = vmatpush2.bf16.msra.mxu0 %v1793
        %1849 = vmatprep.mubr.bf16.mxu0 %v999
        %1850 = vmatmul.mubr.bf16.gmra.mxu0 %v998
        %v1851 = vpop.f32.mrf.mxu0
        %v1852 = vadd.f32 %v1659, %v1851
        %v1853 = vpop.f32.mrf.mxu0
        %v1854 = vpop.f32.mrf.mxu0
        %v1855 = vadd.f32 %v1662, %v1854
        %v1856 = vpop.f32.mrf.mxu0
        %1857 = vmatprep.mubr.bf16.mxu0 %v1001
        %1858 = vmatmul.mubr.bf16.gmra.mxu0 %v1000
        %v1859 = vpop.f32.mrf.mxu0
        %v1860 = vadd.f32 %v1667, %v1859
        %v1861 = vpop.f32.mrf.mxu0
        %v1862 = vpop.f32.mrf.mxu0
        %v1863 = vadd.f32 %v1670, %v1862
        %v1864 = vpop.f32.mrf.mxu0
        %1865 = vmatprep.mubr.bf16.mxu0 %v1003
        %1866 = vmatmul.mubr.bf16.gmra.mxu0 %v1002
        %v1867 = vpop.f32.mrf.mxu0
        %v1868 = vadd.f32 %v1675, %v1867
        %v1869 = vpop.f32.mrf.mxu0
        %v1870 = vpop.f32.mrf.mxu0
        %v1871 = vadd.f32 %v1678, %v1870
        %v1872 = vpop.f32.mrf.mxu0
        %1873 = vmatprep.mubr.bf16.mxu0 %v1005
        %1874 = vmatmul.mubr.bf16.gmra.mxu0 %v1004
        %v1875 = vpop.f32.mrf.mxu0
        %v1876 = vadd.f32 %v1683, %v1875
        %v1877 = vpop.f32.mrf.mxu0
        %v1878 = vpop.f32.mrf.mxu0
        %v1879 = vadd.f32 %v1686, %v1878
        %v1880 = vpop.f32.mrf.mxu0
        %1881 = vmatprep.mubr.bf16.mxu0 %v1007
        %1882 = vmatmul.mubr.bf16.gmra.mxu0 %v1006
        %v1883 = vpop.f32.mrf.mxu0
        %v1884 = vadd.f32 %v1691, %v1883
        %v1885 = vpop.f32.mrf.mxu0
        %v1886 = vpop.f32.mrf.mxu0
        %v1887 = vadd.f32 %v1694, %v1886
        %v1888 = vpop.f32.mrf.mxu0
        %1889 = vmatprep.mubr.bf16.mxu0 %v1009
        %1890 = vmatmul.mubr.bf16.gmra.mxu0 %v1008
        %v1891 = vpop.f32.mrf.mxu0
        %v1892 = vadd.f32 %v1699, %v1891
        %v1893 = vpop.f32.mrf.mxu0
        %v1894 = vpop.f32.mrf.mxu0
        %v1895 = vadd.f32 %v1702, %v1894
        %v1896 = vpop.f32.mrf.mxu0
        %1897 = vmatprep.mubr.bf16.mxu0 %v1011
        %1898 = vmatmul.mubr.bf16.gmra.mxu0 %v1010
        %v1899 = vpop.f32.mrf.mxu0
        %v1900 = vadd.f32 %v1707, %v1899
        %v1901 = vpop.f32.mrf.mxu0
        %v1902 = vpop.f32.mrf.mxu0
        %v1903 = vadd.f32 %v1710, %v1902
        %v1904 = vpop.f32.mrf.mxu0
        %1905 = vmatprep.mubr.bf16.mxu0 %v1013
        %1906 = vmatmul.mubr.bf16.gmra.mxu0 %v1012
        %v1907 = vpop.f32.mrf.mxu0
        %v1908 = vadd.f32 %v1715, %v1907
        %v1909 = vpop.f32.mrf.mxu0
        %v1910 = vpop.f32.mrf.mxu0
        %v1911 = vadd.f32 %v1718, %v1910
        %v1912 = vpop.f32.mrf.mxu0
        %1913 = vdwg.mxu0
        %v1914 = vld [vmem:[%s5] sm:$0x1]
        %v1916 = vlaneseq
        %v1917 = vshrl.u32 %v1916, 7
        %v1918 = vsub.s32 0, %v1917
        %v1919 = vrot.slane %v1914, %v1918
        %v1921 = vadd.f32 %v1852, %v1919
        %v1922 = vadd.f32 %v1855, %v1919
        %v1923 = vadd.f32 %v1860, %v1919
        %v1924 = vadd.f32 %v1863, %v1919
        %v1925 = vadd.f32 %v1868, %v1919
        %v1926 = vadd.f32 %v1871, %v1919
        %v1927 = vadd.f32 %v1876, %v1919
        %v1928 = vadd.f32 %v1879, %v1919
        %v1929 = vadd.f32 %v1884, %v1919
        %v1930 = vadd.f32 %v1887, %v1919
        %v1931 = vadd.f32 %v1892, %v1919
        %v1932 = vadd.f32 %v1895, %v1919
        %v1933 = vadd.f32 %v1900, %v1919
        %v1934 = vadd.f32 %v1903, %v1919
        %v1935 = vadd.f32 %v1908, %v1919
        %v1936 = vadd.f32 %v1911, %v1919
        %1937 = vst [vmem:[%s276] sm:$0xff] %v1921
        %1938 = vst [vmem:[%s276 + $0x8] sm:$0xff] %v1922
        %1939 = vst [vmem:[%s276 + $0x10] sm:$0xff] %v1923
        %1940 = vst [vmem:[%s276 + $0x18] sm:$0xff] %v1924
        %1941 = vst [vmem:[%s276 + $0x20] sm:$0xff] %v1925
        %1942 = vst [vmem:[%s276 + $0x28] sm:$0xff] %v1926
        %1943 = vst [vmem:[%s276 + $0x30] sm:$0xff] %v1927
        %1944 = vst [vmem:[%s276 + $0x38] sm:$0xff] %v1928
        %1945 = vst [vmem:[%s276 + $0x40] sm:$0xff] %v1929
        %1946 = vst [vmem:[%s276 + $0x48] sm:$0xff] %v1930
        %1947 = vst [vmem:[%s276 + $0x50] sm:$0xff] %v1931
        %1948 = vst [vmem:[%s276 + $0x58] sm:$0xff] %v1932
        %1949 = vst [vmem:[%s276 + $0x60] sm:$0xff] %v1933
        %1950 = vst [vmem:[%s276 + $0x68] sm:$0xff] %v1934
        %1951 = vst [vmem:[%s276 + $0x70] sm:$0xff] %v1935
        %1952 = vst [vmem:[%s276 + $0x78] sm:$0xff] %v1936
        %s1953 = sand.u32 %s165, 1
        %s1954 = scalar_lea.sflag [#allocation4], %s1953
        %s1955 = sand.u32 %s165, 1
        %s1956 = smul.addr %s1955, 128
        %s1957 = scalar_lea.vmem [#allocation5], %s1956
        // Predicated region
        $region49: #{tpu_custom_call.1} parent=43 // pred_check
          %p1958 = pneg %p175
        $region50: #{tpu_custom_call.1} parent=43 // pred_check_branch
          %1960 = sbr.rel (%p1958) target = $region52
        $region51: #{tpu_custom_call.1} parent=43 // pred_region
          %s1961 = smul.u32 16, %s21
          %s1963 = ssub.s32 2048, 2048
          %1964 = vsyncadd %s1954, %s1963
          %s1965 = smul.addr %s1961, 128
          %s1966 = scalar_lea.hbm %s6, %s1965
          %s1967 = sshll.u32 %s1957, 4
          %s1968 = int_to_ptr.vmem [resolvable:$true] %s1967
          %1973 = dma.vmem_to_hbm [thread:$0]  %s1968, 2048, %s1966, %s1954, 128, 128, 8
        $region52: #{tpu_custom_call.1} parent=43 // pred_fallthru
          _
      $region44: #{tpu_custom_call.1} parent=5 // pred_fallthru
        _
      %p1974 = scmp.le.s32.totalorder 2, %s16
      // Predicated region
      $region53: #{tpu_custom_call.1} parent=5 // pred_check
        %p1975 = pneg %p1974
      $region54: #{tpu_custom_call.1} parent=5 // pred_check_branch
        %1977 = sbr.rel (%p1975) target = $region56
      $region55: #{tpu_custom_call.1} parent=5 // pred_region
        %s1978 = ssub.s32 %s16, 2
        // Predicated region
        $region57: #{tpu_custom_call.1} parent=55 // pred_check
          %p1979 = pneg %p181
        $region58: #{tpu_custom_call.1} parent=55 // pred_check_branch
          %1981 = sbr.rel (%p1979) target = $region60
        $region59: #{tpu_custom_call.1} parent=55 // pred_region
          %s1982 = sand.u32 %s166, 1
          %s1983 = scalar_lea.sflag [#allocation4], %s1982
          %s1984 = sand.u32 %s166, 1
          %s1985 = smul.addr %s1984, 128
          %s1986 = scalar_lea.vmem [#allocation5], %s1985
          %1987 = dma.done %s1983, 2048
        $region60: #{tpu_custom_call.1} parent=55 // pred_fallthru
          _
      $region56: #{tpu_custom_call.1} parent=5 // pred_fallthru
        _
    $region6: #{tpu_custom_call.1} parent=1 // loop_footer
      %s20 = sadd.s32 1, %s16
    $region7: #{tpu_custom_call.1} parent=1 // loop_footer_branch
      %15 = sbr.rel target = $region3
    $region8: #{tpu_custom_call.1} parent=1 // loop_exit
      _
    %1988 = vsyncpa [#allocation3], 1
    %s1989 = scalar_lea.sflag [#allocation3], 1
    %1990 = vsyncpa %s1989, 1
    %1991 = vsyncpa [#allocation4], 1
    %s1992 = scalar_lea.sflag [#allocation4], 1
    %1993 = vsyncpa %s1992, 1

</llo_original>
